<compile_context>
chip_gen: v7x
topology: tpu7x:2x2x1
jax: 0.10.0
libtpu: 0.0.40
codegen_flags: <defaults>
</compile_context>

<pallas_src>
import jax
import jax.numpy as jnp
from jax.experimental import pallas as pl
from jax.experimental.pallas import tpu as pltpu
import numpy as np


# ---------------------------------------------------------------------------
# helpers
# ---------------------------------------------------------------------------
def _round_up(x, m):
    return ((x + m - 1) // m) * m


def _choose_tile_b(batch, requested):
    """Large batch tiles, but keep >= 2 grid steps when the batch allows
    (pipelining + v7x 2-TensorCore split)."""
    tb = min(requested, _round_up(max((batch + 1) // 2, 8), 8))
    return max(8, tb)


def _vmem_limit_bytes():
    """~3/4 of the running generation's physical VMEM (v7x: 48 MiB of 64;
    v5e/v6e: 96 MiB of 128); conservative fallback if the query is missing."""
    try:
        cap = pltpu.get_tpu_info().vmem_capacity_bytes
    except Exception:
        cap = 64 * 1024 * 1024
    return (int(cap) // 4) * 3


# ---------------------------------------------------------------------------
# Pallas kernel (closure over static sizes / packed-slab offsets)
# ---------------------------------------------------------------------------
def _make_kernel(num_dense, offs, h1p, h2p):
    o_wlin = offs["w_lin"]
    o_b1 = offs["b1"]
    o_b2 = offs["b2"]
    o_wout = offs["w_out"]
    o_blin = offs["b_lin"]

    def kernel(dense_ref, emb_ref, rows_ref, w1d_ref, w1e_ref, w2_ref, out_ref):
        dense = dense_ref[...]                                  # [Tb, Dd] f32
        emb_bf = emb_ref[...]                                   # [Tb, FE] bf16

        # static, lane-aligned slices of the packed f32 slab
        w_lin = rows_ref[:, o_wlin:o_wlin + num_dense]          # [1, Dd]
        b1 = rows_ref[:, o_b1:o_b1 + h1p]                       # [1, h1p]
        b2 = rows_ref[:, o_b2:o_b2 + h2p]                       # [1, h2p]
        w_out = rows_ref[:, o_wout:o_wout + h2p]                # [1, h2p]
        b_lin = rows_ref[:, o_blin:o_blin + 1]                  # [1, 1]

        # ---- first-order linear term: VPU multiply + lane reduction (exact f32)
        linear = jnp.sum(dense * w_lin, axis=1, keepdims=True) + b_lin

        # ---- FM second-order term over the flattened F*E axis (matches the
        #      provided PyTorch forward); f32 math on upcast bf16 embeddings.
        emb = emb_bf.astype(jnp.float32)
        s = jnp.sum(emb, axis=1, keepdims=True)                 # [Tb, 1]
        sq = jnp.sum(emb * emb, axis=1, keepdims=True)          # [Tb, 1]
        fm = 0.5 * (s * s - sq)                                 # [Tb, 1]

        # ---- deep MLP: concat([dense, emb]) folded into a split first-layer
        #      weight.  bf16 MXU matmuls with f32 accumulation; the K=Dd dense
        #      matmul is kept on the MXU (cheaper than a Dd-step VPU fold).
        h1 = (jnp.dot(dense.astype(jnp.bfloat16), w1d_ref[...],
                      preferred_element_type=jnp.float32)
              + jnp.dot(emb_bf, w1e_ref[...],
                        preferred_element_type=jnp.float32)
              + b1)
        h1 = jnp.maximum(h1, 0.0)

        h2 = jnp.dot(h1.astype(jnp.bfloat16), w2_ref[...],
                     preferred_element_type=jnp.float32) + b2
        h2 = jnp.maximum(h2, 0.0)

        # ---- final bias-free projection (dnn_linear): VPU + lane reduction
        dnn = jnp.sum(h2 * w_out, axis=1, keepdims=True)        # [Tb, 1]

        out_ref[...] = jax.nn.sigmoid(linear + fm + dnn)

    return kernel


# ---------------------------------------------------------------------------
# Wrapper: batch-tiled pallas_call with resident weights
# ---------------------------------------------------------------------------
def deepfm_forward(dense_input, sparse_embed, kp, *, tile_b=512):
    """dense_input: [B, Dd] f32, sparse_embed: [B, F*E] bf16 (pre-gathered).
    kp: kernel params from prepare_kernel_params()."""
    B, Dd = dense_input.shape
    FE = sparse_embed.shape[1]
    h1p, h2p = kp["h1p"], kp["h2p"]
    P = kp["rows"].shape[1]

    tile_b = _choose_tile_b(B, tile_b)
    num_tiles = pl.cdiv(B, tile_b)
    Bp = num_tiles * tile_b
    if Bp != B:
        pad = Bp - B
        dense_input = jnp.pad(dense_input, ((0, pad), (0, 0)))
        sparse_embed = jnp.pad(sparse_embed, ((0, pad), (0, 0)))

    kernel = _make_kernel(Dd, kp["offsets"], h1p, h2p)
    vmem_limit = _vmem_limit_bytes()
    args = (dense_input, sparse_embed,
            kp["rows"], kp["w1_dense"], kp["w1_emb"], kp["w2"])

    def build(single_buffer_weights):
        def act(feat):
            # batch-walking activation tiles
            return pl.BlockSpec((tile_b, feat), lambda i: (i, 0))

        def resident(shape):
            # constant index_map -> fetched once, resident in VMEM
            if single_buffer_weights:
                return pl.BlockSpec(shape, lambda i: (0, 0),
                                    pipeline_mode=pl.Buffered(1))
            return pl.BlockSpec(shape, lambda i: (0, 0))

        return pl.pallas_call(
            kernel,
            out_shape=jax.ShapeDtypeStruct((Bp, 1), jnp.float32),
            grid=(num_tiles,),
            in_specs=[
                act(Dd),                    # dense          f32
                act(FE),                    # sparse_embed   bf16
                resident((1, P)),           # packed f32 slab (w_lin|b1|b2|w_out|b_lin)
                resident((Dd, h1p)),        # w1_dense       bf16
                resident((FE, h1p)),        # w1_emb         bf16
                resident((h1p, h2p)),       # w2             bf16
            ],
            out_specs=pl.BlockSpec((tile_b, 1), lambda i: (i, 0)),
            compiler_params=pltpu.CompilerParams(
                dimension_semantics=("parallel",),
                vmem_limit_bytes=vmem_limit,
            ),
        )

    try:
        out = build(True)(*args)
    except Exception:
        # pipeline_mode=pl.Buffered(1) unsupported on this jax build -> default
        # double-buffered resident weights (correctness unchanged).
        out = build(False)(*args)
    return out[:B]


# ---------------------------------------------------------------------------
# Parameter construction (mirrors the PyTorch module __init__)
# ---------------------------------------------------------------------------
def _xavier_normal(key, shape, fan_in, fan_out, gain=1.0):
    std = gain * np.sqrt(2.0 / (fan_in + fan_out))
    return std * jax.random.normal(key, shape, dtype=jnp.float32)


def make_params(key, num_dense, num_sparse, embed_dim, vocab_sizes, dnn_units):
    keys = jax.random.split(key, 8 + num_sparse)
    d_in = num_dense + embed_dim * num_sparse
    h1, h2 = dnn_units

    embed_tables = [
        _xavier_normal(keys[i], (vocab_sizes[i], embed_dim),
                       vocab_sizes[i], embed_dim)
        for i in range(num_sparse)
    ]
    k = num_sparse
    w_lin = _xavier_normal(keys[k + 0], (num_dense, 1), num_dense, 1)
    b_lin = jnp.zeros((1, 1), jnp.float32)
    w1 = _xavier_normal(keys[k + 1], (d_in, h1), d_in, h1)
    b1 = jnp.zeros((1, h1), jnp.float32)
    w2 = _xavier_normal(keys[k + 2], (h1, h2), h1, h2)
    b2 = jnp.zeros((1, h2), jnp.float32)
    w_out = _xavier_normal(keys[k + 3], (h2, 1), h2, 1)

    return {
        "embed_tables": embed_tables,
        "w_lin": w_lin, "b_lin": b_lin,
        "w1": w1, "b1": b1,
        "w2": w2, "b2": b2,
        "w_out": w_out,
    }


def prepare_kernel_params(p, num_dense):
    """Pad hidden dims to lane-dense multiples of 128 (exact: zeros propagate
    through ReLU and zero w_out rows), cast MXU weights to bf16, and pack the
    small f32 vectors into one lane-aligned slab."""
    h1 = p["b1"].shape[1]
    h2 = p["b2"].shape[1]
    h1p = _round_up(h1, 128)
    h2p = _round_up(h2, 128)

    w1 = jnp.pad(p["w1"], ((0, 0), (0, h1p - h1)))
    b1 = jnp.pad(p["b1"], ((0, 0), (0, h1p - h1)))
    w2 = jnp.pad(p["w2"], ((0, h1p - h1), (0, h2p - h2)))
    b2 = jnp.pad(p["b2"], ((0, 0), (0, h2p - h2)))
    w_out = jnp.pad(p["w_out"], ((0, h2p - h2), (0, 0)))
    w_lin_row = p["w_lin"].T                                  # [1, Dd]
    w_out_row = w_out.T                                       # [1, h2p]

    # packed slab: [w_lin | b1 | b2 | w_out | b_lin], all offsets multiples of 128
    dlp = _round_up(num_dense, 128)
    off_wlin = 0
    off_b1 = dlp
    off_b2 = off_b1 + h1p
    off_wout = off_b2 + h2p
    off_blin = off_wout + h2p
    P = off_blin + 128

    rows = jnp.zeros((1, P), jnp.float32)
    rows = rows.at[:, off_wlin:off_wlin + num_dense].set(w_lin_row)
    rows = rows.at[:, off_b1:off_b1 + h1p].set(b1)
    rows = rows.at[:, off_b2:off_b2 + h2p].set(b2)
    rows = rows.at[:, off_wout:off_wout + h2p].set(w_out_row)
    rows = rows.at[:, off_blin:off_blin + 1].set(p["b_lin"])

    return {
        "rows": rows,
        "offsets": {"w_lin": off_wlin, "b1": off_b1, "b2": off_b2,
                    "w_out": off_wout, "b_lin": off_blin},
        "h1p": h1p, "h2p": h2p,
        "w1_dense": w1[:num_dense].astype(jnp.bfloat16),      # [Dd, h1p] bf16
        "w1_emb": w1[num_dense:].astype(jnp.bfloat16),        # [FE, h1p] bf16
        "w2": w2.astype(jnp.bfloat16),                        # [h1p,h2p] bf16
        # unpacked copies for the pure-JAX reference
        "w_lin_row": w_lin_row, "b_lin": p["b_lin"],
        "b1": b1, "b2": b2, "w_out_row": w_out_row,
    }


def gather_sparse_embed(sparse_input, embed_tables):
    # glue: per-field embedding lookup, concatenated, emitted as bf16 so the
    # dominant HBM stream into the kernel is half-width.
    embs = [embed_tables[i][sparse_input[:, i]]
            for i in range(sparse_input.shape[1])]
    return jnp.concatenate(embs, axis=-1).astype(jnp.bfloat16)


# ---------------------------------------------------------------------------
# Pure-JAX reference with identical numerics (bf16 emb / matmul inputs, f32 acc)
# ---------------------------------------------------------------------------
def reference_forward(dense_input, sparse_embed_bf16, kp):
    emb = sparse_embed_bf16.astype(jnp.float32)
    linear = jnp.sum(dense_input * kp["w_lin_row"], axis=1, keepdims=True) \
        + kp["b_lin"]
    fm = 0.5 * (jnp.sum(emb, 1, keepdims=True) ** 2
                - jnp.sum(emb * emb, 1, keepdims=True))
    h1 = (jnp.dot(dense_input.astype(jnp.bfloat16), kp["w1_dense"],
                  preferred_element_type=jnp.float32)
          + jnp.dot(sparse_embed_bf16, kp["w1_emb"],
                    preferred_element_type=jnp.float32)
          + kp["b1"])
    h1 = jnp.maximum(h1, 0.0)
    h2 = jnp.dot(h1.astype(jnp.bfloat16), kp["w2"],
                 preferred_element_type=jnp.float32) + kp["b2"]
    h2 = jnp.maximum(h2, 0.0)
    dnn = jnp.sum(h2 * kp["w_out_row"], axis=1, keepdims=True)
    return jax.nn.sigmoid(linear + fm + dnn)


if __name__ == "__main__":
    B = 256
    NUM_DENSE = 16
    NUM_SPARSE = 4
    EMBED_DIM = 32
    VOCABS = [100, 200, 50, 300]
    DNN_UNITS = (128, 64)

    key = jax.random.PRNGKey(0)
    k_param, k_dense, k_sparse = jax.random.split(key, 3)

    params = make_params(k_param, NUM_DENSE, NUM_SPARSE, EMBED_DIM,
                         VOCABS, DNN_UNITS)
    kparams = prepare_kernel_params(params, NUM_DENSE)

    dense_input = jax.random.normal(k_dense, (B, NUM_DENSE), dtype=jnp.float32)
    sparse_input = jnp.stack(
        [jax.random.randint(jax.random.fold_in(k_sparse, i), (B,), 0, VOCABS[i])
         for i in range(NUM_SPARSE)], axis=1)                 # [B, NUM_SPARSE]

    sparse_embed = gather_sparse_embed(sparse_input, params["embed_tables"])

    out = deepfm_forward(dense_input, sparse_embed, kparams, tile_b=512)
    out = jax.block_until_ready(out)

    ref = reference_forward(dense_input, sparse_embed, kparams)
    np.testing.assert_allclose(np.asarray(out), np.asarray(ref),
                               rtol=1e-3, atol=1e-3)
    print("KERNEL_OK")
</pallas_src>

<mosaic_0001>
module attributes {stable_mosaic.version = 11 : i64} {
  func.func @kernel(%arg0: i32, %arg1: memref<128x16xf32, #tpu.memory_space<vmem>>, %arg2: memref<128x128xbf16, #tpu.memory_space<vmem>>, %arg3: memref<1x640xf32, #tpu.memory_space<vmem>>, %arg4: memref<16x128xbf16, #tpu.memory_space<vmem>>, %arg5: memref<128x128xbf16, #tpu.memory_space<vmem>>, %arg6: memref<128x128xbf16, #tpu.memory_space<vmem>>, %arg7: memref<128x1xf32, #tpu.memory_space<vmem>>) attributes {dimension_semantics = [#tpu.dimension_semantics<parallel>], iteration_bounds = array<i64: 2>, scalar_prefetch = 0 : i64, scratch_operands = 0 : i64, tpu.core_type = #tpu.core_type<tc>, window_params = [{transform_indices = @transform_0, window_bounds = array<i64: 128, 16>}, {transform_indices = @transform_1, window_bounds = array<i64: 128, 128>}, {pipeline_mode = #tpu.pipeline_mode<synchronous>, transform_indices = @transform_2, window_bounds = array<i64: 1, 640>}, {pipeline_mode = #tpu.pipeline_mode<synchronous>, transform_indices = @transform_3, window_bounds = array<i64: 16, 128>}, {pipeline_mode = #tpu.pipeline_mode<synchronous>, transform_indices = @transform_4, window_bounds = array<i64: 128, 128>}, {pipeline_mode = #tpu.pipeline_mode<synchronous>, transform_indices = @transform_5, window_bounds = array<i64: 128, 128>}, {transform_indices = @transform_6, window_bounds = array<i64: 128, 1>}]} {
    %c0 = arith.constant 0 : index
    %c0_0 = arith.constant 0 : index
    %0 = vector.load %arg1[%c0, %c0_0] : memref<128x16xf32, #tpu.memory_space<vmem>>, vector<128x16xf32>
    %c0_1 = arith.constant 0 : index
    %c0_2 = arith.constant 0 : index
    %1 = vector.load %arg2[%c0_1, %c0_2] : memref<128x128xbf16, #tpu.memory_space<vmem>>, vector<128x128xbf16>
    %c0_3 = arith.constant 0 : index
    %c0_4 = arith.constant 0 : index
    %2 = vector.load %arg3[%c0_3, %c0_4] : memref<1x640xf32, #tpu.memory_space<vmem>>, vector<1x16xf32>
    %c0_5 = arith.constant 0 : index
    %c128 = arith.constant 128 : index
    %3 = vector.load %arg3[%c0_5, %c128] : memref<1x640xf32, #tpu.memory_space<vmem>>, vector<1x128xf32>
    %c0_6 = arith.constant 0 : index
    %c256 = arith.constant 256 : index
    %4 = vector.load %arg3[%c0_6, %c256] : memref<1x640xf32, #tpu.memory_space<vmem>>, vector<1x128xf32>
    %c0_7 = arith.constant 0 : index
    %c384 = arith.constant 384 : index
    %5 = vector.load %arg3[%c0_7, %c384] : memref<1x640xf32, #tpu.memory_space<vmem>>, vector<1x128xf32>
    %c0_8 = arith.constant 0 : index
    %c512 = arith.constant 512 : index
    %6 = vector.load %arg3[%c0_8, %c512] : memref<1x640xf32, #tpu.memory_space<vmem>>, vector<1x1xf32>
    %7 = vector.broadcast %2 : vector<1x16xf32> to vector<128x16xf32>
    %8 = arith.mulf %0, %7 : vector<128x16xf32>
    %cst = arith.constant dense<0.000000e+00> : vector<128xf32>
    %9 = vector.multi_reduction <add>, %8, %cst [1] : vector<128x16xf32> to vector<128xf32>
    %10 = vector.shape_cast %9 : vector<128xf32> to vector<128x1xf32>
    %11 = vector.broadcast %6 : vector<1x1xf32> to vector<128x1xf32>
    %12 = arith.addf %10, %11 : vector<128x1xf32>
    %13 = arith.extf %1 : vector<128x128xbf16> to vector<128x128xf32>
    %cst_9 = arith.constant dense<0.000000e+00> : vector<128xf32>
    %14 = vector.multi_reduction <add>, %13, %cst_9 [1] : vector<128x128xf32> to vector<128xf32>
    %15 = vector.shape_cast %14 : vector<128xf32> to vector<128x1xf32>
    %16 = arith.mulf %13, %13 : vector<128x128xf32>
    %cst_10 = arith.constant dense<0.000000e+00> : vector<128xf32>
    %17 = vector.multi_reduction <add>, %16, %cst_10 [1] : vector<128x128xf32> to vector<128xf32>
    %18 = vector.shape_cast %17 : vector<128xf32> to vector<128x1xf32>
    %19 = arith.mulf %15, %15 : vector<128x1xf32>
    %20 = arith.subf %19, %18 : vector<128x1xf32>
    %cst_11 = arith.constant 5.000000e-01 : f32
    %21 = vector.broadcast %cst_11 : f32 to vector<128x1xf32>
    %22 = arith.mulf %21, %20 : vector<128x1xf32>
    %23 = arith.truncf %0 : vector<128x16xf32> to vector<128x16xbf16>
    %c0_12 = arith.constant 0 : index
    %c0_13 = arith.constant 0 : index
    %24 = vector.load %arg4[%c0_12, %c0_13] : memref<16x128xbf16, #tpu.memory_space<vmem>>, vector<16x128xbf16>
    %cst_14 = arith.constant dense<0.000000e+00> : vector<128x128xf32>
    %25 = tpu.matmul %23, %24, %cst_14 {dimension_numbers = #tpu.dot_dimension_numbers<[1], [0], [0], [1], [0, 0, 1, 1], [], []>} : vector<128x16xbf16>, vector<16x128xbf16>, vector<128x128xf32> -> vector<128x128xf32>
    %c0_15 = arith.constant 0 : index
    %c0_16 = arith.constant 0 : index
    %26 = vector.load %arg5[%c0_15, %c0_16] : memref<128x128xbf16, #tpu.memory_space<vmem>>, vector<128x128xbf16>
    %cst_17 = arith.constant dense<0.000000e+00> : vector<128x128xf32>
    %27 = tpu.matmul %1, %26, %cst_17 {dimension_numbers = #tpu.dot_dimension_numbers<[1], [0], [0], [1], [0, 0, 1, 1], [], []>} : vector<128x128xbf16>, vector<128x128xbf16>, vector<128x128xf32> -> vector<128x128xf32>
    %28 = arith.addf %25, %27 : vector<128x128xf32>
    %29 = vector.broadcast %3 : vector<1x128xf32> to vector<128x128xf32>
    %30 = arith.addf %28, %29 : vector<128x128xf32>
    %cst_18 = arith.constant 0.000000e+00 : f32
    %31 = vector.broadcast %cst_18 : f32 to vector<128x128xf32>
    %32 = arith.maximumf %30, %31 : vector<128x128xf32>
    %33 = arith.truncf %32 : vector<128x128xf32> to vector<128x128xbf16>
    %c0_19 = arith.constant 0 : index
    %c0_20 = arith.constant 0 : index
    %34 = vector.load %arg6[%c0_19, %c0_20] : memref<128x128xbf16, #tpu.memory_space<vmem>>, vector<128x128xbf16>
    %cst_21 = arith.constant dense<0.000000e+00> : vector<128x128xf32>
    %35 = tpu.matmul %33, %34, %cst_21 {dimension_numbers = #tpu.dot_dimension_numbers<[1], [0], [0], [1], [0, 0, 1, 1], [], []>} : vector<128x128xbf16>, vector<128x128xbf16>, vector<128x128xf32> -> vector<128x128xf32>
    %36 = vector.broadcast %4 : vector<1x128xf32> to vector<128x128xf32>
    %37 = arith.addf %35, %36 : vector<128x128xf32>
    %cst_22 = arith.constant 0.000000e+00 : f32
    %38 = vector.broadcast %cst_22 : f32 to vector<128x128xf32>
    %39 = arith.maximumf %37, %38 : vector<128x128xf32>
    %40 = vector.broadcast %5 : vector<1x128xf32> to vector<128x128xf32>
    %41 = arith.mulf %39, %40 : vector<128x128xf32>
    %cst_23 = arith.constant dense<0.000000e+00> : vector<128xf32>
    %42 = vector.multi_reduction <add>, %41, %cst_23 [1] : vector<128x128xf32> to vector<128xf32>
    %43 = vector.shape_cast %42 : vector<128xf32> to vector<128x1xf32>
    %44 = arith.addf %12, %22 : vector<128x1xf32>
    %45 = arith.addf %44, %43 : vector<128x1xf32>
    %46 = arith.negf %45 : vector<128x1xf32>
    %47 = math.exp %46 : vector<128x1xf32>
    %cst_24 = arith.constant 1.000000e+00 : f32
    %48 = vector.broadcast %cst_24 : f32 to vector<128x1xf32>
    %49 = arith.addf %48, %47 : vector<128x1xf32>
    %50 = arith.divf %48, %49 : vector<128x1xf32>
    %c0_25 = arith.constant 0 : index
    %c0_26 = arith.constant 0 : index
    %51 = vector.load %arg7[%c0_25, %c0_26] : memref<128x1xf32, #tpu.memory_space<vmem>>, vector<128x1xf32>
    tpu.vector_store %arg7[%c0_25, %c0_26], %50 {strides = array<i32>} : memref<128x1xf32, #tpu.memory_space<vmem>>, vector<128x1xf32>,
    return
  }
  func.func @transform_0(%arg0: i32) -> (i32, i32) {
    %c0_i32 = arith.constant 0 : i32
    %c0_i32_0 = arith.constant 0 : i32
    return %arg0, %c0_i32 : i32, i32
  }
  func.func @transform_1(%arg0: i32) -> (i32, i32) {
    %c0_i32 = arith.constant 0 : i32
    %c0_i32_0 = arith.constant 0 : i32
    return %arg0, %c0_i32 : i32, i32
  }
  func.func @transform_2(%arg0: i32) -> (i32, i32) {
    %c0_i32 = arith.constant 0 : i32
    %c0_i32_0 = arith.constant 0 : i32
    %c0_i32_1 = arith.constant 0 : i32
    return %c0_i32, %c0_i32_0 : i32, i32
  }
  func.func @transform_3(%arg0: i32) -> (i32, i32) {
    %c0_i32 = arith.constant 0 : i32
    %c0_i32_0 = arith.constant 0 : i32
    %c0_i32_1 = arith.constant 0 : i32
    return %c0_i32, %c0_i32_0 : i32, i32
  }
  func.func @transform_4(%arg0: i32) -> (i32, i32) {
    %c0_i32 = arith.constant 0 : i32
    %c0_i32_0 = arith.constant 0 : i32
    %c0_i32_1 = arith.constant 0 : i32
    return %c0_i32, %c0_i32_0 : i32, i32
  }
  func.func @transform_5(%arg0: i32) -> (i32, i32) {
    %c0_i32 = arith.constant 0 : i32
    %c0_i32_0 = arith.constant 0 : i32
    %c0_i32_1 = arith.constant 0 : i32
    return %c0_i32, %c0_i32_0 : i32, i32
  }
  func.func @transform_6(%arg0: i32) -> (i32, i32) {
    %c0_i32 = arith.constant 0 : i32
    %c0_i32_0 = arith.constant 0 : i32
    return %arg0, %c0_i32 : i32, i32
  }
}

module attributes {stable_mosaic.version = 11 : i64} {
  func.func @kernel(%arg0: i32, %arg1: memref<128x16xf32, #tpu.memory_space<vmem>>, %arg2: memref<128x128xbf16, #tpu.memory_space<vmem>>, %arg3: memref<1x640xf32, #tpu.memory_space<vmem>>, %arg4: memref<16x128xbf16, #tpu.memory_space<vmem>>, %arg5: memref<128x128xbf16, #tpu.memory_space<vmem>>, %arg6: memref<128x128xbf16, #tpu.memory_space<vmem>>, %arg7: memref<128x1xf32, #tpu.memory_space<vmem>>) attributes {dimension_semantics = [#tpu.dimension_semantics<parallel>], iteration_bounds = array<i64: 2>, scalar_prefetch = 0 : i64, scratch_operands = 0 : i64, tpu.core_type = #tpu.core_type<tc>, window_params = [{transform_indices = @transform_0, window_bounds = array<i64: 128, 16>}, {transform_indices = @transform_1, window_bounds = array<i64: 128, 128>}, {pipeline_mode = #tpu.pipeline_mode<synchronous>, transform_indices = @transform_2, window_bounds = array<i64: 1, 640>}, {pipeline_mode = #tpu.pipeline_mode<synchronous>, transform_indices = @transform_3, window_bounds = array<i64: 16, 128>}, {pipeline_mode = #tpu.pipeline_mode<synchronous>, transform_indices = @transform_4, window_bounds = array<i64: 128, 128>}, {pipeline_mode = #tpu.pipeline_mode<synchronous>, transform_indices = @transform_5, window_bounds = array<i64: 128, 128>}, {transform_indices = @transform_6, window_bounds = array<i64: 128, 1>}]} {
    %c0 = arith.constant 0 : index
    %c0_0 = arith.constant 0 : index
    %0 = vector.load %arg1[%c0, %c0_0] : memref<128x16xf32, #tpu.memory_space<vmem>>, vector<128x16xf32>
    %c0_1 = arith.constant 0 : index
    %c0_2 = arith.constant 0 : index
    %1 = vector.load %arg2[%c0_1, %c0_2] : memref<128x128xbf16, #tpu.memory_space<vmem>>, vector<128x128xbf16>
    %c0_3 = arith.constant 0 : index
    %c0_4 = arith.constant 0 : index
    %2 = vector.load %arg3[%c0_3, %c0_4] : memref<1x640xf32, #tpu.memory_space<vmem>>, vector<1x16xf32>
    %c0_5 = arith.constant 0 : index
    %c128 = arith.constant 128 : index
    %3 = vector.load %arg3[%c0_5, %c128] : memref<1x640xf32, #tpu.memory_space<vmem>>, vector<1x128xf32>
    %c0_6 = arith.constant 0 : index
    %c256 = arith.constant 256 : index
    %4 = vector.load %arg3[%c0_6, %c256] : memref<1x640xf32, #tpu.memory_space<vmem>>, vector<1x128xf32>
    %c0_7 = arith.constant 0 : index
    %c384 = arith.constant 384 : index
    %5 = vector.load %arg3[%c0_7, %c384] : memref<1x640xf32, #tpu.memory_space<vmem>>, vector<1x128xf32>
    %c0_8 = arith.constant 0 : index
    %c512 = arith.constant 512 : index
    %6 = vector.load %arg3[%c0_8, %c512] : memref<1x640xf32, #tpu.memory_space<vmem>>, vector<1x1xf32>
    %7 = vector.broadcast %2 : vector<1x16xf32> to vector<128x16xf32>
    %8 = arith.mulf %0, %7 : vector<128x16xf32>
    %cst = arith.constant dense<0.000000e+00> : vector<128xf32>
    %9 = vector.multi_reduction <add>, %8, %cst [1] : vector<128x16xf32> to vector<128xf32>
    %10 = vector.shape_cast %9 : vector<128xf32> to vector<128x1xf32>
    %11 = vector.broadcast %6 : vector<1x1xf32> to vector<128x1xf32>
    %12 = arith.addf %10, %11 : vector<128x1xf32>
    %13 = arith.extf %1 : vector<128x128xbf16> to vector<128x128xf32>
    %cst_9 = arith.constant dense<0.000000e+00> : vector<128xf32>
    %14 = vector.multi_reduction <add>, %13, %cst_9 [1] : vector<128x128xf32> to vector<128xf32>
    %15 = vector.shape_cast %14 : vector<128xf32> to vector<128x1xf32>
    %16 = arith.mulf %13, %13 : vector<128x128xf32>
    %cst_10 = arith.constant dense<0.000000e+00> : vector<128xf32>
    %17 = vector.multi_reduction <add>, %16, %cst_10 [1] : vector<128x128xf32> to vector<128xf32>
    %18 = vector.shape_cast %17 : vector<128xf32> to vector<128x1xf32>
    %19 = arith.mulf %15, %15 : vector<128x1xf32>
    %20 = arith.subf %19, %18 : vector<128x1xf32>
    %cst_11 = arith.constant 5.000000e-01 : f32
    %21 = vector.broadcast %cst_11 : f32 to vector<128x1xf32>
    %22 = arith.mulf %21, %20 : vector<128x1xf32>
    %23 = arith.truncf %0 : vector<128x16xf32> to vector<128x16xbf16>
    %c0_12 = arith.constant 0 : index
    %c0_13 = arith.constant 0 : index
    %24 = vector.load %arg4[%c0_12, %c0_13] : memref<16x128xbf16, #tpu.memory_space<vmem>>, vector<16x128xbf16>
    %cst_14 = arith.constant dense<0.000000e+00> : vector<128x128xf32>
    %25 = tpu.matmul %23, %24, %cst_14 {dimension_numbers = #tpu.dot_dimension_numbers<[1], [0], [0], [1], [0, 0, 1, 1], [], []>} : vector<128x16xbf16>, vector<16x128xbf16>, vector<128x128xf32> -> vector<128x128xf32>
    %c0_15 = arith.constant 0 : index
    %c0_16 = arith.constant 0 : index
    %26 = vector.load %arg5[%c0_15, %c0_16] : memref<128x128xbf16, #tpu.memory_space<vmem>>, vector<128x128xbf16>
    %cst_17 = arith.constant dense<0.000000e+00> : vector<128x128xf32>
    %27 = tpu.matmul %1, %26, %cst_17 {dimension_numbers = #tpu.dot_dimension_numbers<[1], [0], [0], [1], [0, 0, 1, 1], [], []>} : vector<128x128xbf16>, vector<128x128xbf16>, vector<128x128xf32> -> vector<128x128xf32>
    %28 = arith.addf %25, %27 : vector<128x128xf32>
    %29 = vector.broadcast %3 : vector<1x128xf32> to vector<128x128xf32>
    %30 = arith.addf %28, %29 : vector<128x128xf32>
    %cst_18 = arith.constant 0.000000e+00 : f32
    %31 = vector.broadcast %cst_18 : f32 to vector<128x128xf32>
    %32 = arith.maximumf %30, %31 : vector<128x128xf32>
    %33 = arith.truncf %32 : vector<128x128xf32> to vector<128x128xbf16>
    %c0_19 = arith.constant 0 : index
    %c0_20 = arith.constant 0 : index
    %34 = vector.load %arg6[%c0_19, %c0_20] : memref<128x128xbf16, #tpu.memory_space<vmem>>, vector<128x128xbf16>
    %cst_21 = arith.constant dense<0.000000e+00> : vector<128x128xf32>
    %35 = tpu.matmul %33, %34, %cst_21 {dimension_numbers = #tpu.dot_dimension_numbers<[1], [0], [0], [1], [0, 0, 1, 1], [], []>} : vector<128x128xbf16>, vector<128x128xbf16>, vector<128x128xf32> -> vector<128x128xf32>
    %36 = vector.broadcast %4 : vector<1x128xf32> to vector<128x128xf32>
    %37 = arith.addf %35, %36 : vector<128x128xf32>
    %cst_22 = arith.constant 0.000000e+00 : f32
    %38 = vector.broadcast %cst_22 : f32 to vector<128x128xf32>
    %39 = arith.maximumf %37, %38 : vector<128x128xf32>
    %40 = vector.broadcast %5 : vector<1x128xf32> to vector<128x128xf32>
    %41 = arith.mulf %39, %40 : vector<128x128xf32>
    %cst_23 = arith.constant dense<0.000000e+00> : vector<128xf32>
    %42 = vector.multi_reduction <add>, %41, %cst_23 [1] : vector<128x128xf32> to vector<128xf32>
    %43 = vector.shape_cast %42 : vector<128xf32> to vector<128x1xf32>
    %44 = arith.addf %12, %22 : vector<128x1xf32>
    %45 = arith.addf %44, %43 : vector<128x1xf32>
    %46 = arith.negf %45 : vector<128x1xf32>
    %47 = math.exp %46 : vector<128x1xf32>
    %cst_24 = arith.constant 1.000000e+00 : f32
    %48 = vector.broadcast %cst_24 : f32 to vector<128x1xf32>
    %49 = arith.addf %48, %47 : vector<128x1xf32>
    %50 = arith.divf %48, %49 : vector<128x1xf32>
    %c0_25 = arith.constant 0 : index
    %c0_26 = arith.constant 0 : index
    %51 = vector.load %arg7[%c0_25, %c0_26] : memref<128x1xf32, #tpu.memory_space<vmem>>, vector<128x1xf32>
    tpu.vector_store %arg7[%c0_25, %c0_26], %50 {strides = array<i32>} : memref<128x1xf32, #tpu.memory_space<vmem>>, vector<128x1xf32>,
    return
  }
  func.func @transform_0(%arg0: i32) -> (i32, i32) {
    %c0_i32 = arith.constant 0 : i32
    %c0_i32_0 = arith.constant 0 : i32
    return %arg0, %c0_i32 : i32, i32
  }
  func.func @transform_1(%arg0: i32) -> (i32, i32) {
    %c0_i32 = arith.constant 0 : i32
    %c0_i32_0 = arith.constant 0 : i32
    return %arg0, %c0_i32 : i32, i32
  }
  func.func @transform_2(%arg0: i32) -> (i32, i32) {
    %c0_i32 = arith.constant 0 : i32
    %c0_i32_0 = arith.constant 0 : i32
    %c0_i32_1 = arith.constant 0 : i32
    return %c0_i32, %c0_i32_0 : i32, i32
  }
  func.func @transform_3(%arg0: i32) -> (i32, i32) {
    %c0_i32 = arith.constant 0 : i32
    %c0_i32_0 = arith.constant 0 : i32
    %c0_i32_1 = arith.constant 0 : i32
    return %c0_i32, %c0_i32_0 : i32, i32
  }
  func.func @transform_4(%arg0: i32) -> (i32, i32) {
    %c0_i32 = arith.constant 0 : i32
    %c0_i32_0 = arith.constant 0 : i32
    %c0_i32_1 = arith.constant 0 : i32
    return %c0_i32, %c0_i32_0 : i32, i32
  }
  func.func @transform_5(%arg0: i32) -> (i32, i32) {
    %c0_i32 = arith.constant 0 : i32
    %c0_i32_0 = arith.constant 0 : i32
    %c0_i32_1 = arith.constant 0 : i32
    return %c0_i32, %c0_i32_0 : i32, i32
  }
  func.func @transform_6(%arg0: i32) -> (i32, i32) {
    %c0_i32 = arith.constant 0 : i32
    %c0_i32_0 = arith.constant 0 : i32
    return %arg0, %c0_i32 : i32, i32
  }
}

</mosaic_0001>

<llo_original>
// kernel: tpu_custom_call.1
$region0: #{tpu_custom_call.1}
  #allocation0 [shape = 'u32[]', space=smem, size = 0x4, offset = 0x4, fixed_abs, tag = 'smem constant byte address 0x4 - core index']
  #allocation1 [shape = 'u32[144,128]{1,0:T(1,128)}', space=vmem, size = 0x12000, scoped, tag = 'internal scratch']
  %s0 = inlined_call_operand.vmem [shape: f32[256,16], index: 0, kind: input, shape index: {}]
  %s1 = inlined_call_operand.vmem [shape: bf16[256,128], index: 1, kind: input, shape index: {}]
  %s2 = inlined_call_operand.vmem [shape: f32[1,640], index: 2, kind: input, shape index: {}]
  %s3 = inlined_call_operand.vmem [shape: bf16[16,128], index: 3, kind: input, shape index: {}]
  %s4 = inlined_call_operand.vmem [shape: bf16[128,128], index: 4, kind: input, shape index: {}]
  %s5 = inlined_call_operand.vmem [shape: bf16[128,128], index: 5, kind: input, shape index: {}]
  %s6 = inlined_call_operand.vmem [shape: f32[256,1], index: 6, kind: output, shape index: {}]
  %s7 = sld [smem:[#allocation0]]
  $region57: #{tpu_custom_call.1} parent=0
    _
  %s9 = ssub.s32 1, %s7
  %s10 = scalar_select 0, %s9, %s7
  loop: start=0, step=1, limit=4
  $region2: #{tpu_custom_call.1} parent=0 // loop_pre_header
    _
  $region3: #{tpu_custom_call.1} parent=0 // loop_header
    %s12 = sphi 0, %s16
    %p13 = scmp.ge.s32.totalorder %s12, 4
    %s22 = sphi 0, %s24
    %s25 = sphi 0, %s22
    %s26 = sphi 0, %s25
    %s42 = sphi 0, %s26
    %s48 = sphi 0, %s50
    %s51 = sphi 0, %s48
    %s52 = sphi 0, %s51
    %s68 = sphi 0, %s52
    %s72 = sphi 0, %s72
    %s74 = sphi 0, %s72
    %s75 = sphi 0, %s74
    %s89 = sphi 0, %s75
    %s93 = sphi 0, %s93
    %s95 = sphi 0, %s93
    %s96 = sphi 0, %s95
    %s110 = sphi 0, %s96
    %s114 = sphi 0, %s114
    %s116 = sphi 0, %s114
    %s117 = sphi 0, %s116
    %s131 = sphi 0, %s117
    %s135 = sphi 0, %s135
    %s137 = sphi 0, %s135
    %s138 = sphi 0, %s137
    %s152 = sphi 0, %s138
    %s158 = sphi 0, %s160
    %s161 = sphi 0, %s158
    %s162 = sphi 0, %s161
    %s178 = sphi 0, %s162
  $region4: #{tpu_custom_call.1} parent=0 // loop_header_branch
    %15 = sbr.rel (%p13) target = $region8
  $region5: #{tpu_custom_call.1} parent=0 // loop_body
    %s17 = ssub.s32 %s12, 1
    %s18 = ssub.s32 %s12, 2
    %s19 = sadd.s32 %s12, 1
    %s20 = ssub.s32 %s12, %s19
    %p21 = scmp.eq.s32.totalorder %s20, 0
    %s23 = sadd.s32 %s22, 1
    %s24 = scalar_select %p21, %s22, %s23
    %p27 = pneg %p21
    %p28 = scmp.eq.s32.totalorder %s12, 1
    %p29 = por %p27, %p28
    %p30 = scmp.ne.s32.totalorder %s22, %s25
    %p31 = scmp.eq.s32.totalorder %s12, 0
    %p32 = por %p30, %p31
    %p33 = scmp.ne.s32.totalorder %s22, %s25
    %p34 = scmp.eq.s32.totalorder %s17, 1
    %p35 = por %p33, %p34
    %p36 = scmp.ne.s32.totalorder %s25, %s26
    %p37 = scmp.eq.s32.totalorder %s17, 0
    %p38 = por %p36, %p37
    %p39 = scmp.ne.s32.totalorder %s25, %s26
    %p40 = scmp.eq.s32.totalorder %s18, 1
    %p41 = por %p39, %p40
    %p43 = scmp.ne.s32.totalorder %s26, %s42
    %p44 = scmp.eq.s32.totalorder %s18, 0
    %p45 = por %p43, %p44
    %s46 = ssub.s32 %s12, %s19
    %p47 = scmp.eq.s32.totalorder %s46, 0
    %s49 = sadd.s32 %s48, 1
    %s50 = scalar_select %p47, %s48, %s49
    %p53 = pneg %p47
    %p54 = scmp.eq.s32.totalorder %s12, 1
    %p55 = por %p53, %p54
    %p56 = scmp.ne.s32.totalorder %s48, %s51
    %p57 = scmp.eq.s32.totalorder %s12, 0
    %p58 = por %p56, %p57
    %p59 = scmp.ne.s32.totalorder %s48, %s51
    %p60 = scmp.eq.s32.totalorder %s17, 1
    %p61 = por %p59, %p60
    %p62 = scmp.ne.s32.totalorder %s51, %s52
    %p63 = scmp.eq.s32.totalorder %s17, 0
    %p64 = por %p62, %p63
    %p65 = scmp.ne.s32.totalorder %s51, %s52
    %p66 = scmp.eq.s32.totalorder %s18, 1
    %p67 = por %p65, %p66
    %p69 = scmp.ne.s32.totalorder %s52, %s68
    %p70 = scmp.eq.s32.totalorder %s18, 0
    %p71 = por %p69, %p70
    %s73 = sadd.s32 %s72, 1
    %p76 = scmp.eq.s32.totalorder %s12, 1
    %p77 = scmp.ne.s32.totalorder %s72, %s74
    %p78 = scmp.eq.s32.totalorder %s12, 0
    %p79 = por %p77, %p78
    %p80 = scmp.ne.s32.totalorder %s72, %s74
    %p81 = scmp.eq.s32.totalorder %s17, 1
    %p82 = por %p80, %p81
    %p83 = scmp.ne.s32.totalorder %s74, %s75
    %p84 = scmp.eq.s32.totalorder %s17, 0
    %p85 = por %p83, %p84
    %p86 = scmp.ne.s32.totalorder %s74, %s75
    %p87 = scmp.eq.s32.totalorder %s18, 1
    %p88 = por %p86, %p87
    %p90 = scmp.ne.s32.totalorder %s75, %s89
    %p91 = scmp.eq.s32.totalorder %s18, 0
    %p92 = por %p90, %p91
    %s94 = sadd.s32 %s93, 1
    %p97 = scmp.eq.s32.totalorder %s12, 1
    %p98 = scmp.ne.s32.totalorder %s93, %s95
    %p99 = scmp.eq.s32.totalorder %s12, 0
    %p100 = por %p98, %p99
    %p101 = scmp.ne.s32.totalorder %s93, %s95
    %p102 = scmp.eq.s32.totalorder %s17, 1
    %p103 = por %p101, %p102
    %p104 = scmp.ne.s32.totalorder %s95, %s96
    %p105 = scmp.eq.s32.totalorder %s17, 0
    %p106 = por %p104, %p105
    %p107 = scmp.ne.s32.totalorder %s95, %s96
    %p108 = scmp.eq.s32.totalorder %s18, 1
    %p109 = por %p107, %p108
    %p111 = scmp.ne.s32.totalorder %s96, %s110
    %p112 = scmp.eq.s32.totalorder %s18, 0
    %p113 = por %p111, %p112
    %s115 = sadd.s32 %s114, 1
    %p118 = scmp.eq.s32.totalorder %s12, 1
    %p119 = scmp.ne.s32.totalorder %s114, %s116
    %p120 = scmp.eq.s32.totalorder %s12, 0
    %p121 = por %p119, %p120
    %p122 = scmp.ne.s32.totalorder %s114, %s116
    %p123 = scmp.eq.s32.totalorder %s17, 1
    %p124 = por %p122, %p123
    %p125 = scmp.ne.s32.totalorder %s116, %s117
    %p126 = scmp.eq.s32.totalorder %s17, 0
    %p127 = por %p125, %p126
    %p128 = scmp.ne.s32.totalorder %s116, %s117
    %p129 = scmp.eq.s32.totalorder %s18, 1
    %p130 = por %p128, %p129
    %p132 = scmp.ne.s32.totalorder %s117, %s131
    %p133 = scmp.eq.s32.totalorder %s18, 0
    %p134 = por %p132, %p133
    %s136 = sadd.s32 %s135, 1
    %p139 = scmp.eq.s32.totalorder %s12, 1
    %p140 = scmp.ne.s32.totalorder %s135, %s137
    %p141 = scmp.eq.s32.totalorder %s12, 0
    %p142 = por %p140, %p141
    %p143 = scmp.ne.s32.totalorder %s135, %s137
    %p144 = scmp.eq.s32.totalorder %s17, 1
    %p145 = por %p143, %p144
    %p146 = scmp.ne.s32.totalorder %s137, %s138
    %p147 = scmp.eq.s32.totalorder %s17, 0
    %p148 = por %p146, %p147
    %p149 = scmp.ne.s32.totalorder %s137, %s138
    %p150 = scmp.eq.s32.totalorder %s18, 1
    %p151 = por %p149, %p150
    %p153 = scmp.ne.s32.totalorder %s138, %s152
    %p154 = scmp.eq.s32.totalorder %s18, 0
    %p155 = por %p153, %p154
    %s156 = ssub.s32 %s12, %s19
    %p157 = scmp.eq.s32.totalorder %s156, 0
    %s159 = sadd.s32 %s158, 1
    %s160 = scalar_select %p157, %s158, %s159
    %p163 = pneg %p157
    %p164 = scmp.eq.s32.totalorder %s12, 1
    %p165 = por %p163, %p164
    %p166 = scmp.ne.s32.totalorder %s158, %s161
    %p167 = scmp.eq.s32.totalorder %s12, 0
    %p168 = por %p166, %p167
    %p169 = scmp.ne.s32.totalorder %s158, %s161
    %p170 = scmp.eq.s32.totalorder %s17, 1
    %p171 = por %p169, %p170
    %p172 = scmp.ne.s32.totalorder %s161, %s162
    %p173 = scmp.eq.s32.totalorder %s17, 0
    %p174 = por %p172, %p173
    %p175 = scmp.ne.s32.totalorder %s161, %s162
    %p176 = scmp.eq.s32.totalorder %s18, 1
    %p177 = por %p175, %p176
    %p179 = scmp.ne.s32.totalorder %s162, %s178
    %p180 = scmp.eq.s32.totalorder %s18, 0
    %p181 = por %p179, %p180
    %p182 = scmp.le.s32.totalorder 1, %s12
    %p183 = scmp.lt.s32.totalorder %s12, 3
    %p184 = pnand %p182, %p183
    %p185 = pneg %p184
    // Predicated region
    $region9: #{tpu_custom_call.1} parent=5 // pred_check
      _
    $region10: #{tpu_custom_call.1} parent=5 // pred_check_branch
      %187 = sbr.rel (%p184) target = $region12
    $region11: #{tpu_custom_call.1} parent=5 // pred_region
      %s188 = ssub.s32 %s12, 1
      // Predicated region
      $region13: #{tpu_custom_call.1} parent=11 // pred_check
        %p189 = pneg %p85
      $region14: #{tpu_custom_call.1} parent=11 // pred_check_branch
        %191 = sbr.rel (%p189) target = $region16
      $region15: #{tpu_custom_call.1} parent=11 // pred_region
        _
      $region16: #{tpu_custom_call.1} parent=11 // pred_fallthru
        _
      // Predicated region
      $region17: #{tpu_custom_call.1} parent=11 // pred_check
        %p192 = pneg %p106
      $region18: #{tpu_custom_call.1} parent=11 // pred_check_branch
        %194 = sbr.rel (%p192) target = $region20
      $region19: #{tpu_custom_call.1} parent=11 // pred_region
        _
      $region20: #{tpu_custom_call.1} parent=11 // pred_fallthru
        _
      // Predicated region
      $region21: #{tpu_custom_call.1} parent=11 // pred_check
        %p195 = pneg %p127
      $region22: #{tpu_custom_call.1} parent=11 // pred_check_branch
        %197 = sbr.rel (%p195) target = $region24
      $region23: #{tpu_custom_call.1} parent=11 // pred_region
        _
      $region24: #{tpu_custom_call.1} parent=11 // pred_fallthru
        _
      // Predicated region
      $region25: #{tpu_custom_call.1} parent=11 // pred_check
        %p198 = pneg %p148
      $region26: #{tpu_custom_call.1} parent=11 // pred_check_branch
        %200 = sbr.rel (%p198) target = $region28
      $region27: #{tpu_custom_call.1} parent=11 // pred_region
        _
      $region28: #{tpu_custom_call.1} parent=11 // pred_fallthru
        _
    $region12: #{tpu_custom_call.1} parent=5 // pred_fallthru
      _
    %p201 = scmp.lt.s32.totalorder %s12, 2
    // Predicated region
    $region29: #{tpu_custom_call.1} parent=5 // pred_check
      %p202 = pneg %p201
    $region30: #{tpu_custom_call.1} parent=5 // pred_check_branch
      %204 = sbr.rel (%p202) target = $region32
    $region31: #{tpu_custom_call.1} parent=5 // pred_region
      // Predicated region
      $region33: #{tpu_custom_call.1} parent=31 // pred_check
        %p205 = pneg %p32
      $region34: #{tpu_custom_call.1} parent=31 // pred_check_branch
        %207 = sbr.rel (%p205) target = $region36
      $region35: #{tpu_custom_call.1} parent=31 // pred_region
        %s208 = smul.u32 16, %s12
        %p209 = scmp.lt.s32.totalorder %s208, 31
        %s210 = scalar_select %p209, %s208, 31
        %s211 = smul.addr %s210, 8
        %s212 = scalar_lea.vmem %s0, %s211
        %s213 = smul.u32 16, %s12
      $region36: #{tpu_custom_call.1} parent=31 // pred_fallthru
        _
      // Predicated region
      $region37: #{tpu_custom_call.1} parent=31 // pred_check
        %p214 = pneg %p58
      $region38: #{tpu_custom_call.1} parent=31 // pred_check_branch
        %216 = sbr.rel (%p214) target = $region40
      $region39: #{tpu_custom_call.1} parent=31 // pred_region
        %s217 = smul.u32 16, %s12
        %p218 = scmp.lt.s32.totalorder %s217, 31
        %s219 = scalar_select %p218, %s217, 31
        %s220 = smul.addr %s219, 4
        %s221 = scalar_lea.vmem %s1, %s220
        %s222 = smul.u32 16, %s12
      $region40: #{tpu_custom_call.1} parent=31 // pred_fallthru
        _
    $region32: #{tpu_custom_call.1} parent=5 // pred_fallthru
      _
    %p223 = scmp.le.s32.totalorder 1, %s12
    %p224 = scmp.lt.s32.totalorder %s12, 3
    %p225 = pnand %p223, %p224
    %p226 = pneg %p225
    // Predicated region
    $region41: #{tpu_custom_call.1} parent=5 // pred_check
      _
    $region42: #{tpu_custom_call.1} parent=5 // pred_check_branch
      %228 = sbr.rel (%p225) target = $region44
    $region43: #{tpu_custom_call.1} parent=5 // pred_region
      %s229 = ssub.s32 %s12, 1
      %s230 = smul.u32 16, %s17
      %p231 = scmp.lt.s32.totalorder %s230, 31
      %s232 = scalar_select %p231, %s230, 31
      %s233 = smul.addr %s232, 8
      %s234 = scalar_lea.vmem %s0, %s233
      %p235 = pneg %p38
      %p236 = pneg %p35
      %s237 = smul.u32 16, %s17
      %p238 = scmp.lt.s32.totalorder %s237, 31
      %s239 = scalar_select %p238, %s237, 31
      %s240 = smul.addr %s239, 4
      %s241 = scalar_lea.vmem %s1, %s240
      %p242 = pneg %p64
      %p243 = pneg %p61
      %p244 = pneg %p85
      %p245 = pneg %p82
      %p246 = pneg %p106
      %p247 = pneg %p103
      %p248 = pneg %p127
      %p249 = pneg %p124
      %p250 = pneg %p148
      %p251 = pneg %p145
      %p252 = pneg %p174
      %p253 = pneg %p171
      %s254 = smul.u32 16, %s17
      %p255 = scmp.lt.s32.totalorder %s254, 31
      %s256 = scalar_select %p255, %s254, 31
      %s257 = smul.addr %s256, 8
      %s258 = scalar_lea.vmem %s6, %s257
      %s259 = smul.u32 16, %s17
      %p260 = scmp.lt.s32.totalorder %s259, 31
      %s261 = scalar_select %p260, %s259, 31
      %s262 = smul.addr %s261, 8
      %s263 = scalar_lea.vmem %s0, %s262
      %s264 = smul.u32 16, %s17
      %s265 = smul.u32 16, %s17
      %p266 = scmp.lt.s32.totalorder %s265, 31
      %s267 = scalar_select %p266, %s265, 31
      %s268 = smul.addr %s267, 4
      %s269 = scalar_lea.vmem %s1, %s268
      %s270 = smul.u32 16, %s17
      %s271 = smul.u32 16, %s17
      %p272 = scmp.lt.s32.totalorder %s271, 31
      %s273 = scalar_select %p272, %s271, 31
      %s274 = smul.addr %s273, 8
      %s275 = scalar_lea.vmem %s6, %s274
      %s276 = smul.u32 16, %s17
      %v278 = vld [vmem:[%s263] sm:$0xff]
      %v279 = vld [vmem:[%s263 + $0x8] sm:$0xff]
      %v280 = vld [vmem:[%s263 + $0x10] sm:$0xff]
      %v281 = vld [vmem:[%s263 + $0x18] sm:$0xff]
      %v282 = vld [vmem:[%s263 + $0x20] sm:$0xff]
      %v283 = vld [vmem:[%s263 + $0x28] sm:$0xff]
      %v284 = vld [vmem:[%s263 + $0x30] sm:$0xff]
      %v285 = vld [vmem:[%s263 + $0x38] sm:$0xff]
      %v286 = vld [vmem:[%s263 + $0x40] sm:$0xff]
      %v287 = vld [vmem:[%s263 + $0x48] sm:$0xff]
      %v288 = vld [vmem:[%s263 + $0x50] sm:$0xff]
      %v289 = vld [vmem:[%s263 + $0x58] sm:$0xff]
      %v290 = vld [vmem:[%s263 + $0x60] sm:$0xff]
      %v291 = vld [vmem:[%s263 + $0x68] sm:$0xff]
      %v292 = vld [vmem:[%s263 + $0x70] sm:$0xff]
      %v293 = vld [vmem:[%s263 + $0x78] sm:$0xff]
      %v294 = vld [vmem:[%s269] sm:$0xf]
      %v295 = vld [vmem:[%s269 + $0x4] sm:$0xf]
      %v296 = vld [vmem:[%s269 + $0x8] sm:$0xf]
      %v297 = vld [vmem:[%s269 + $0xc] sm:$0xf]
      %v298 = vld [vmem:[%s269 + $0x10] sm:$0xf]
      %v299 = vld [vmem:[%s269 + $0x14] sm:$0xf]
      %v300 = vld [vmem:[%s269 + $0x18] sm:$0xf]
      %v301 = vld [vmem:[%s269 + $0x1c] sm:$0xf]
      %v302 = vld [vmem:[%s269 + $0x20] sm:$0xf]
      %v303 = vld [vmem:[%s269 + $0x24] sm:$0xf]
      %v304 = vld [vmem:[%s269 + $0x28] sm:$0xf]
      %v305 = vld [vmem:[%s269 + $0x2c] sm:$0xf]
      %v306 = vld [vmem:[%s269 + $0x30] sm:$0xf]
      %v307 = vld [vmem:[%s269 + $0x34] sm:$0xf]
      %v308 = vld [vmem:[%s269 + $0x38] sm:$0xf]
      %v309 = vld [vmem:[%s269 + $0x3c] sm:$0xf]
      %v310 = vld [vmem:[%s2] sm:$0x1]
      %v311 = vld [vmem:[%s2 + $0x1] sm:$0x1]
      %v312 = vld [vmem:[%s2 + $0x2] sm:$0x1]
      %v313 = vld [vmem:[%s2 + $0x3] sm:$0x1]
      %v314 = vld [vmem:[%s2 + $0x4] sm:$0x1]
      %v316 = vlaneseq
      %v317 = vshrl.u32 %v316, 7
      %v318 = vsub.s32 0, %v317
      %v319 = vrot.slane %v310, %v318
      %v321 = vmul.f32 %v278, %v319
      %v322 = vmul.f32 %v279, %v319
      %v323 = vmul.f32 %v280, %v319
      %v324 = vmul.f32 %v281, %v319
      %v325 = vmul.f32 %v282, %v319
      %v326 = vmul.f32 %v283, %v319
      %v327 = vmul.f32 %v284, %v319
      %v328 = vmul.f32 %v285, %v319
      %v329 = vmul.f32 %v286, %v319
      %v330 = vmul.f32 %v287, %v319
      %v331 = vmul.f32 %v288, %v319
      %v332 = vmul.f32 %v289, %v319
      %v333 = vmul.f32 %v290, %v319
      %v334 = vmul.f32 %v291, %v319
      %v335 = vmul.f32 %v292, %v319
      %v336 = vmul.f32 %v293, %v319
      %vm337 = vcmask 130048
      %v338 = vsel %vm337, %v321, 0.0
      %339 = vadd.xlane.f32.xlu0 %v338
      %v340 = vpop.xlane.xlu0 %339
      %v341 = vsel %vm337, %v322, 0.0
      %342 = vadd.xlane.f32.xlu0 %v341
      %v343 = vpop.xlane.xlu0 %342
      %v344 = vsel %vm337, %v323, 0.0
      %345 = vadd.xlane.f32.xlu0 %v344
      %v346 = vpop.xlane.xlu0 %345
      %v347 = vsel %vm337, %v324, 0.0
      %348 = vadd.xlane.f32.xlu0 %v347
      %v349 = vpop.xlane.xlu0 %348
      %v350 = vsel %vm337, %v325, 0.0
      %351 = vadd.xlane.f32.xlu0 %v350
      %v352 = vpop.xlane.xlu0 %351
      %v353 = vsel %vm337, %v326, 0.0
      %354 = vadd.xlane.f32.xlu0 %v353
      %v355 = vpop.xlane.xlu0 %354
      %v356 = vsel %vm337, %v327, 0.0
      %357 = vadd.xlane.f32.xlu0 %v356
      %v358 = vpop.xlane.xlu0 %357
      %v359 = vsel %vm337, %v328, 0.0
      %360 = vadd.xlane.f32.xlu0 %v359
      %v361 = vpop.xlane.xlu0 %360
      %v362 = vsel %vm337, %v329, 0.0
      %363 = vadd.xlane.f32.xlu0 %v362
      %v364 = vpop.xlane.xlu0 %363
      %v365 = vsel %vm337, %v330, 0.0
      %366 = vadd.xlane.f32.xlu0 %v365
      %v367 = vpop.xlane.xlu0 %366
      %v368 = vsel %vm337, %v331, 0.0
      %369 = vadd.xlane.f32.xlu0 %v368
      %v370 = vpop.xlane.xlu0 %369
      %v371 = vsel %vm337, %v332, 0.0
      %372 = vadd.xlane.f32.xlu0 %v371
      %v373 = vpop.xlane.xlu0 %372
      %v374 = vsel %vm337, %v333, 0.0
      %375 = vadd.xlane.f32.xlu0 %v374
      %v376 = vpop.xlane.xlu0 %375
      %v377 = vsel %vm337, %v334, 0.0
      %378 = vadd.xlane.f32.xlu0 %v377
      %v379 = vpop.xlane.xlu0 %378
      %v380 = vsel %vm337, %v335, 0.0
      %381 = vadd.xlane.f32.xlu0 %v380
      %v382 = vpop.xlane.xlu0 %381
      %v383 = vsel %vm337, %v336, 0.0
      %384 = vadd.xlane.f32.xlu0 %v383
      %v385 = vpop.xlane.xlu0 %384
      %v387 = vlaneseq
      %v388 = vshrl.u32 %v387, 7
      %v389 = vsub.s32 0, %v388
      %v390 = vrot.slane %v314, %v389
      %v392 = vadd.f32 %v340, %v390
      %v393 = vadd.f32 %v343, %v390
      %v394 = vadd.f32 %v346, %v390
      %v395 = vadd.f32 %v349, %v390
      %v396 = vadd.f32 %v352, %v390
      %v397 = vadd.f32 %v355, %v390
      %v398 = vadd.f32 %v358, %v390
      %v399 = vadd.f32 %v361, %v390
      %v400 = vadd.f32 %v364, %v390
      %v401 = vadd.f32 %v367, %v390
      %v402 = vadd.f32 %v370, %v390
      %v403 = vadd.f32 %v373, %v390
      %v404 = vadd.f32 %v376, %v390
      %v405 = vadd.f32 %v379, %v390
      %v406 = vadd.f32 %v382, %v390
      %v407 = vadd.f32 %v385, %v390
      %v408 = vunpack.c.l.bf16 %v294
      %v409 = vunpack.c.l.bf16 %v295
      %v410 = vunpack.c.l.bf16 %v296
      %v411 = vunpack.c.l.bf16 %v297
      %v412 = vunpack.c.l.bf16 %v298
      %v413 = vunpack.c.l.bf16 %v299
      %v414 = vunpack.c.l.bf16 %v300
      %v415 = vunpack.c.l.bf16 %v301
      %v416 = vunpack.c.l.bf16 %v302
      %v417 = vunpack.c.l.bf16 %v303
      %v418 = vunpack.c.l.bf16 %v304
      %v419 = vunpack.c.l.bf16 %v305
      %v420 = vunpack.c.l.bf16 %v306
      %v421 = vunpack.c.l.bf16 %v307
      %v422 = vunpack.c.l.bf16 %v308
      %v423 = vunpack.c.l.bf16 %v309
      %424 = vadd.xlane.f32.xlu0 %v408
      %v425 = vpop.xlane.xlu0 %424
      %426 = vadd.xlane.f32.xlu0 %v409
      %v427 = vpop.xlane.xlu0 %426
      %428 = vadd.xlane.f32.xlu0 %v410
      %v429 = vpop.xlane.xlu0 %428
      %430 = vadd.xlane.f32.xlu0 %v411
      %v431 = vpop.xlane.xlu0 %430
      %432 = vadd.xlane.f32.xlu0 %v412
      %v433 = vpop.xlane.xlu0 %432
      %434 = vadd.xlane.f32.xlu0 %v413
      %v435 = vpop.xlane.xlu0 %434
      %436 = vadd.xlane.f32.xlu0 %v414
      %v437 = vpop.xlane.xlu0 %436
      %438 = vadd.xlane.f32.xlu0 %v415
      %v439 = vpop.xlane.xlu0 %438
      %440 = vadd.xlane.f32.xlu0 %v416
      %v441 = vpop.xlane.xlu0 %440
      %442 = vadd.xlane.f32.xlu0 %v417
      %v443 = vpop.xlane.xlu0 %442
      %444 = vadd.xlane.f32.xlu0 %v418
      %v445 = vpop.xlane.xlu0 %444
      %446 = vadd.xlane.f32.xlu0 %v419
      %v447 = vpop.xlane.xlu0 %446
      %448 = vadd.xlane.f32.xlu0 %v420
      %v449 = vpop.xlane.xlu0 %448
      %450 = vadd.xlane.f32.xlu0 %v421
      %v451 = vpop.xlane.xlu0 %450
      %452 = vadd.xlane.f32.xlu0 %v422
      %v453 = vpop.xlane.xlu0 %452
      %454 = vadd.xlane.f32.xlu0 %v423
      %v455 = vpop.xlane.xlu0 %454
      %v456 = vmul.f32 %v408, %v408
      %v457 = vmul.f32 %v409, %v409
      %v458 = vmul.f32 %v410, %v410
      %v459 = vmul.f32 %v411, %v411
      %v460 = vmul.f32 %v412, %v412
      %v461 = vmul.f32 %v413, %v413
      %v462 = vmul.f32 %v414, %v414
      %v463 = vmul.f32 %v415, %v415
      %v464 = vmul.f32 %v416, %v416
      %v465 = vmul.f32 %v417, %v417
      %v466 = vmul.f32 %v418, %v418
      %v467 = vmul.f32 %v419, %v419
      %v468 = vmul.f32 %v420, %v420
      %v469 = vmul.f32 %v421, %v421
      %v470 = vmul.f32 %v422, %v422
      %v471 = vmul.f32 %v423, %v423
      %472 = vadd.xlane.f32.xlu0 %v456
      %v473 = vpop.xlane.xlu0 %472
      %474 = vadd.xlane.f32.xlu0 %v457
      %v475 = vpop.xlane.xlu0 %474
      %476 = vadd.xlane.f32.xlu0 %v458
      %v477 = vpop.xlane.xlu0 %476
      %478 = vadd.xlane.f32.xlu0 %v459
      %v479 = vpop.xlane.xlu0 %478
      %480 = vadd.xlane.f32.xlu0 %v460
      %v481 = vpop.xlane.xlu0 %480
      %482 = vadd.xlane.f32.xlu0 %v461
      %v483 = vpop.xlane.xlu0 %482
      %484 = vadd.xlane.f32.xlu0 %v462
      %v485 = vpop.xlane.xlu0 %484
      %486 = vadd.xlane.f32.xlu0 %v463
      %v487 = vpop.xlane.xlu0 %486
      %488 = vadd.xlane.f32.xlu0 %v464
      %v489 = vpop.xlane.xlu0 %488
      %490 = vadd.xlane.f32.xlu0 %v465
      %v491 = vpop.xlane.xlu0 %490
      %492 = vadd.xlane.f32.xlu0 %v466
      %v493 = vpop.xlane.xlu0 %492
      %494 = vadd.xlane.f32.xlu0 %v467
      %v495 = vpop.xlane.xlu0 %494
      %496 = vadd.xlane.f32.xlu0 %v468
      %v497 = vpop.xlane.xlu0 %496
      %498 = vadd.xlane.f32.xlu0 %v469
      %v499 = vpop.xlane.xlu0 %498
      %500 = vadd.xlane.f32.xlu0 %v470
      %v501 = vpop.xlane.xlu0 %500
      %502 = vadd.xlane.f32.xlu0 %v471
      %v503 = vpop.xlane.xlu0 %502
      %v504 = vmul.f32 %v425, %v425
      %v505 = vmul.f32 %v427, %v427
      %v506 = vmul.f32 %v429, %v429
      %v507 = vmul.f32 %v431, %v431
      %v508 = vmul.f32 %v433, %v433
      %v509 = vmul.f32 %v435, %v435
      %v510 = vmul.f32 %v437, %v437
      %v511 = vmul.f32 %v439, %v439
      %v512 = vmul.f32 %v441, %v441
      %v513 = vmul.f32 %v443, %v443
      %v514 = vmul.f32 %v445, %v445
      %v515 = vmul.f32 %v447, %v447
      %v516 = vmul.f32 %v449, %v449
      %v517 = vmul.f32 %v451, %v451
      %v518 = vmul.f32 %v453, %v453
      %v519 = vmul.f32 %v455, %v455
      %v520 = vsub.f32 %v504, %v473
      %v521 = vsub.f32 %v505, %v475
      %v522 = vsub.f32 %v506, %v477
      %v523 = vsub.f32 %v507, %v479
      %v524 = vsub.f32 %v508, %v481
      %v525 = vsub.f32 %v509, %v483
      %v526 = vsub.f32 %v510, %v485
      %v527 = vsub.f32 %v511, %v487
      %v528 = vsub.f32 %v512, %v489
      %v529 = vsub.f32 %v513, %v491
      %v530 = vsub.f32 %v514, %v493
      %v531 = vsub.f32 %v515, %v495
      %v532 = vsub.f32 %v516, %v497
      %v533 = vsub.f32 %v517, %v499
      %v534 = vsub.f32 %v518, %v501
      %v535 = vsub.f32 %v519, %v503
      %v536 = vmul.f32 %v520, 0.5
      %v537 = vmul.f32 %v521, 0.5
      %v538 = vmul.f32 %v522, 0.5
      %v539 = vmul.f32 %v523, 0.5
      %v540 = vmul.f32 %v524, 0.5
      %v541 = vmul.f32 %v525, 0.5
      %v542 = vmul.f32 %v526, 0.5
      %v543 = vmul.f32 %v527, 0.5
      %v544 = vmul.f32 %v528, 0.5
      %v545 = vmul.f32 %v529, 0.5
      %v546 = vmul.f32 %v530, 0.5
      %v547 = vmul.f32 %v531, 0.5
      %v548 = vmul.f32 %v532, 0.5
      %v549 = vmul.f32 %v533, 0.5
      %v550 = vmul.f32 %v534, 0.5
      %v551 = vmul.f32 %v535, 0.5
      %v552 = vpack.c.bf16 %v279, %v278
      %v553 = vpack.c.bf16 %v281, %v280
      %v554 = vpack.c.bf16 %v283, %v282
      %v555 = vpack.c.bf16 %v285, %v284
      %v556 = vpack.c.bf16 %v287, %v286
      %v557 = vpack.c.bf16 %v289, %v288
      %v558 = vpack.c.bf16 %v291, %v290
      %v559 = vpack.c.bf16 %v293, %v292
      %v560 = vld [vmem:[%s3] sm:$0xf]
      %v561 = vld [vmem:[%s3 + $0x4] sm:$0xf]
      %v562 = vld [vmem:[%s4] sm:$0xf]
      %v563 = vld [vmem:[%s4 + $0x4] sm:$0xf]
      %v564 = vld [vmem:[%s4 + $0x8] sm:$0xf]
      %v565 = vld [vmem:[%s4 + $0xc] sm:$0xf]
      %v566 = vld [vmem:[%s4 + $0x10] sm:$0xf]
      %v567 = vld [vmem:[%s4 + $0x14] sm:$0xf]
      %v568 = vld [vmem:[%s4 + $0x18] sm:$0xf]
      %v569 = vld [vmem:[%s4 + $0x1c] sm:$0xf]
      %v570 = vld [vmem:[%s4 + $0x20] sm:$0xf]
      %v571 = vld [vmem:[%s4 + $0x24] sm:$0xf]
      %v572 = vld [vmem:[%s4 + $0x28] sm:$0xf]
      %v573 = vld [vmem:[%s4 + $0x2c] sm:$0xf]
      %v574 = vld [vmem:[%s4 + $0x30] sm:$0xf]
      %v575 = vld [vmem:[%s4 + $0x34] sm:$0xf]
      %v576 = vld [vmem:[%s4 + $0x38] sm:$0xf]
      %v577 = vld [vmem:[%s4 + $0x3c] sm:$0xf]
      %v594 = vunpack.c.l.b16 %v294
      %v595 = vunpack.c.l.b16 %v295
      %v596 = vunpack.c.l.b16 %v296
      %v597 = vunpack.c.l.b16 %v297
      %v598 = vunpack.c.l.b16 %v298
      %v599 = vunpack.c.l.b16 %v299
      %v600 = vunpack.c.l.b16 %v300
      %v601 = vunpack.c.l.b16 %v301
      %v602 = vunpack.c.l.b16 %v302
      %v603 = vunpack.c.l.b16 %v303
      %v604 = vunpack.c.l.b16 %v304
      %v605 = vunpack.c.l.b16 %v305
      %v606 = vunpack.c.l.b16 %v306
      %v607 = vunpack.c.l.b16 %v307
      %v608 = vunpack.c.l.b16 %v308
      %v609 = vunpack.c.l.b16 %v309
      %v610 = vpack.c.b16 %v595, %v594
      %v611 = vpack.c.b16 %v597, %v596
      %v612 = vpack.c.b16 %v599, %v598
      %v613 = vpack.c.b16 %v601, %v600
      %v614 = vpack.c.b16 %v603, %v602
      %v615 = vpack.c.b16 %v605, %v604
      %v616 = vpack.c.b16 %v607, %v606
      %v617 = vpack.c.b16 %v609, %v608
      %v642 = vunpack.c.l.b16 %v562
      %v643 = vunpack.c.l.b16 %v563
      %v644 = vunpack.c.l.b16 %v564
      %v645 = vunpack.c.l.b16 %v565
      %v646 = vunpack.c.l.b16 %v566
      %v647 = vunpack.c.l.b16 %v567
      %v648 = vunpack.c.l.b16 %v568
      %v649 = vunpack.c.l.b16 %v569
      %v650 = vunpack.c.l.b16 %v570
      %v651 = vunpack.c.l.b16 %v571
      %v652 = vunpack.c.l.b16 %v572
      %v653 = vunpack.c.l.b16 %v573
      %v654 = vunpack.c.l.b16 %v574
      %v655 = vunpack.c.l.b16 %v575
      %v656 = vunpack.c.l.b16 %v576
      %v657 = vunpack.c.l.b16 %v577
      %v658 = vpack.c.b16 %v643, %v642
      %v659 = vpack.c.b16 %v645, %v644
      %v660 = vpack.c.b16 %v647, %v646
      %v661 = vpack.c.b16 %v649, %v648
      %v662 = vpack.c.b16 %v651, %v650
      %v663 = vpack.c.b16 %v653, %v652
      %v664 = vpack.c.b16 %v655, %v654
      %v665 = vpack.c.b16 %v657, %v656
      %674 = vmatprep.subr.bf16.mxu0 0
      %675 = vmatpush1.bf16.msra.mxu0 %v658
      %676 = vmatprep.subr.bf16.mxu0 0
      %677 = vmatpush1.bf16.msra.mxu0 %v659
      %678 = vmatprep.subr.bf16.mxu0 0
      %679 = vmatpush1.bf16.msra.mxu0 %v660
      %680 = vmatprep.subr.bf16.mxu0 0
      %681 = vmatpush1.bf16.msra.mxu0 %v661
      %682 = vmatprep.subr.bf16.mxu0 0
      %683 = vmatpush1.bf16.msra.mxu0 %v662
      %684 = vmatprep.subr.bf16.mxu0 0
      %685 = vmatpush1.bf16.msra.mxu0 %v663
      %686 = vmatprep.subr.bf16.mxu0 0
      %687 = vmatpush1.bf16.msra.mxu0 %v664
      %688 = vmatprep.subr.bf16.mxu0 0
      %689 = vmatpush1.bf16.msra.mxu0 %v665
      %690 = vmatprep.subr.bf16.mxu0 0
      %691 = vmatpush1.bf16.msra.mxu0 0
      %692 = vmatprep.subr.bf16.mxu0 0
      %693 = vmatpush1.bf16.msra.mxu0 0
      %694 = vmatprep.subr.bf16.mxu0 0
      %695 = vmatpush1.bf16.msra.mxu0 0
      %696 = vmatprep.subr.bf16.mxu0 0
      %697 = vmatpush1.bf16.msra.mxu0 0
      %698 = vmatprep.subr.bf16.mxu0 0
      %699 = vmatpush1.bf16.msra.mxu0 0
      %700 = vmatprep.subr.bf16.mxu0 0
      %701 = vmatpush1.bf16.msra.mxu0 0
      %702 = vmatprep.subr.bf16.mxu0 0
      %703 = vmatpush1.bf16.msra.mxu0 0
      %704 = vmatprep.subr.bf16.mxu0 0
      %705 = vmatpush1.bf16.msra.mxu0 0
      %706 = vmatprep.mubr.bf16.mxu0 0
      %707 = vmatmul.mubr.bf16.gmra.mrb[0].mxu0 %v610
      %v708 = vpop.f32.mrb[0].mxu0
      %v709 = vadd.f32 0.0, %v708
      %v710 = vpop.f32.mrb[0].mxu0
      %v711 = vpop.f32.mrb[0].mxu0
      %v712 = vadd.f32 0.0, %v711
      %v713 = vpop.f32.mrb[0].mxu0
      %714 = vmatprep.mubr.bf16.mxu0 0
      %715 = vmatmul.mubr.bf16.gmra.mrb[0].mxu0 %v611
      %v716 = vpop.f32.mrb[0].mxu0
      %v717 = vadd.f32 0.0, %v716
      %v718 = vpop.f32.mrb[0].mxu0
      %v719 = vpop.f32.mrb[0].mxu0
      %v720 = vadd.f32 0.0, %v719
      %v721 = vpop.f32.mrb[0].mxu0
      %722 = vmatprep.mubr.bf16.mxu0 0
      %723 = vmatmul.mubr.bf16.gmra.mrb[0].mxu0 %v612
      %v724 = vpop.f32.mrb[0].mxu0
      %v725 = vadd.f32 0.0, %v724
      %v726 = vpop.f32.mrb[0].mxu0
      %v727 = vpop.f32.mrb[0].mxu0
      %v728 = vadd.f32 0.0, %v727
      %v729 = vpop.f32.mrb[0].mxu0
      %730 = vmatprep.mubr.bf16.mxu0 0
      %731 = vmatmul.mubr.bf16.gmra.mrb[0].mxu0 %v613
      %v732 = vpop.f32.mrb[0].mxu0
      %v733 = vadd.f32 0.0, %v732
      %v734 = vpop.f32.mrb[0].mxu0
      %v735 = vpop.f32.mrb[0].mxu0
      %v736 = vadd.f32 0.0, %v735
      %v737 = vpop.f32.mrb[0].mxu0
      %738 = vmatprep.mubr.bf16.mxu0 0
      %739 = vmatmul.mubr.bf16.gmra.mrb[0].mxu0 %v614
      %v740 = vpop.f32.mrb[0].mxu0
      %v741 = vadd.f32 0.0, %v740
      %v742 = vpop.f32.mrb[0].mxu0
      %v743 = vpop.f32.mrb[0].mxu0
      %v744 = vadd.f32 0.0, %v743
      %v745 = vpop.f32.mrb[0].mxu0
      %746 = vmatprep.mubr.bf16.mxu0 0
      %747 = vmatmul.mubr.bf16.gmra.mrb[0].mxu0 %v615
      %v748 = vpop.f32.mrb[0].mxu0
      %v749 = vadd.f32 0.0, %v748
      %v750 = vpop.f32.mrb[0].mxu0
      %v751 = vpop.f32.mrb[0].mxu0
      %v752 = vadd.f32 0.0, %v751
      %v753 = vpop.f32.mrb[0].mxu0
      %754 = vmatprep.mubr.bf16.mxu0 0
      %755 = vmatmul.mubr.bf16.gmra.mrb[0].mxu0 %v616
      %v756 = vpop.f32.mrb[0].mxu0
      %v757 = vadd.f32 0.0, %v756
      %v758 = vpop.f32.mrb[0].mxu0
      %v759 = vpop.f32.mrb[0].mxu0
      %v760 = vadd.f32 0.0, %v759
      %v761 = vpop.f32.mrb[0].mxu0
      %762 = vmatprep.mubr.bf16.mxu0 0
      %763 = vmatmul.mubr.bf16.gmra.mrb[0].mxu0 %v617
      %v764 = vpop.f32.mrb[0].mxu0
      %v765 = vadd.f32 0.0, %v764
      %v766 = vpop.f32.mrb[0].mxu0
      %v767 = vpop.f32.mrb[0].mxu0
      %v768 = vadd.f32 0.0, %v767
      %v769 = vpop.f32.mrb[0].mxu0
      %770 = vdwg.mxu0
      %v773 = vunpack.c.l.b16 %v560
      %v774 = vunpack.c.l.b16 %v561
      %v775 = vpack.c.b16 %v774, %v773
      %v778 = vsel %vm337, %v552, 0
      %v781 = vsel %vm337, %v553, 0
      %v784 = vsel %vm337, %v554, 0
      %v787 = vsel %vm337, %v555, 0
      %v790 = vsel %vm337, %v556, 0
      %v793 = vsel %vm337, %v557, 0
      %v796 = vsel %vm337, %v558, 0
      %v799 = vsel %vm337, %v559, 0
      %801 = vmatprep.subr.bf16.mxu0 0
      %802 = vmatpush1.bf16.msra.mxu0 %v775
      %803 = vmatprep.subr.bf16.mxu0 0
      %804 = vmatpush1.bf16.msra.mxu0 0
      %805 = vmatprep.subr.bf16.mxu0 0
      %806 = vmatpush1.bf16.msra.mxu0 0
      %807 = vmatprep.subr.bf16.mxu0 0
      %808 = vmatpush1.bf16.msra.mxu0 0
      %809 = vmatprep.subr.bf16.mxu0 0
      %810 = vmatpush1.bf16.msra.mxu0 0
      %811 = vmatprep.subr.bf16.mxu0 0
      %812 = vmatpush1.bf16.msra.mxu0 0
      %813 = vmatprep.subr.bf16.mxu0 0
      %814 = vmatpush1.bf16.msra.mxu0 0
      %815 = vmatprep.subr.bf16.mxu0 0
      %816 = vmatpush1.bf16.msra.mxu0 0
      %817 = vmatprep.subr.bf16.mxu0 0
      %818 = vmatpush1.bf16.msra.mxu0 0
      %819 = vmatprep.subr.bf16.mxu0 0
      %820 = vmatpush1.bf16.msra.mxu0 0
      %821 = vmatprep.subr.bf16.mxu0 0
      %822 = vmatpush1.bf16.msra.mxu0 0
      %823 = vmatprep.subr.bf16.mxu0 0
      %824 = vmatpush1.bf16.msra.mxu0 0
      %825 = vmatprep.subr.bf16.mxu0 0
      %826 = vmatpush1.bf16.msra.mxu0 0
      %827 = vmatprep.subr.bf16.mxu0 0
      %828 = vmatpush1.bf16.msra.mxu0 0
      %829 = vmatprep.subr.bf16.mxu0 0
      %830 = vmatpush1.bf16.msra.mxu0 0
      %831 = vmatprep.subr.bf16.mxu0 0
      %832 = vmatpush1.bf16.msra.mxu0 0
      %833 = vmatprep.mubr.bf16.mxu0 0
      %834 = vmatmul.mubr.bf16.gmra.mrb[0].mxu0 %v778
      %v835 = vpop.f32.mrb[0].mxu0
      %v836 = vadd.f32 %v709, %v835
      %v837 = vpop.f32.mrb[0].mxu0
      %v838 = vpop.f32.mrb[0].mxu0
      %v839 = vadd.f32 %v712, %v838
      %v840 = vpop.f32.mrb[0].mxu0
      %841 = vmatprep.mubr.bf16.mxu0 0
      %842 = vmatmul.mubr.bf16.gmra.mrb[0].mxu0 %v781
      %v843 = vpop.f32.mrb[0].mxu0
      %v844 = vadd.f32 %v717, %v843
      %v845 = vpop.f32.mrb[0].mxu0
      %v846 = vpop.f32.mrb[0].mxu0
      %v847 = vadd.f32 %v720, %v846
      %v848 = vpop.f32.mrb[0].mxu0
      %849 = vmatprep.mubr.bf16.mxu0 0
      %850 = vmatmul.mubr.bf16.gmra.mrb[0].mxu0 %v784
      %v851 = vpop.f32.mrb[0].mxu0
      %v852 = vadd.f32 %v725, %v851
      %v853 = vpop.f32.mrb[0].mxu0
      %v854 = vpop.f32.mrb[0].mxu0
      %v855 = vadd.f32 %v728, %v854
      %v856 = vpop.f32.mrb[0].mxu0
      %857 = vmatprep.mubr.bf16.mxu0 0
      %858 = vmatmul.mubr.bf16.gmra.mrb[0].mxu0 %v787
      %v859 = vpop.f32.mrb[0].mxu0
      %v860 = vadd.f32 %v733, %v859
      %v861 = vpop.f32.mrb[0].mxu0
      %v862 = vpop.f32.mrb[0].mxu0
      %v863 = vadd.f32 %v736, %v862
      %v864 = vpop.f32.mrb[0].mxu0
      %865 = vmatprep.mubr.bf16.mxu0 0
      %866 = vmatmul.mubr.bf16.gmra.mrb[0].mxu0 %v790
      %v867 = vpop.f32.mrb[0].mxu0
      %v868 = vadd.f32 %v741, %v867
      %v869 = vpop.f32.mrb[0].mxu0
      %v870 = vpop.f32.mrb[0].mxu0
      %v871 = vadd.f32 %v744, %v870
      %v872 = vpop.f32.mrb[0].mxu0
      %873 = vmatprep.mubr.bf16.mxu0 0
      %874 = vmatmul.mubr.bf16.gmra.mrb[0].mxu0 %v793
      %v875 = vpop.f32.mrb[0].mxu0
      %v876 = vadd.f32 %v749, %v875
      %v877 = vpop.f32.mrb[0].mxu0
      %v878 = vpop.f32.mrb[0].mxu0
      %v879 = vadd.f32 %v752, %v878
      %v880 = vpop.f32.mrb[0].mxu0
      %881 = vmatprep.mubr.bf16.mxu0 0
      %882 = vmatmul.mubr.bf16.gmra.mrb[0].mxu0 %v796
      %v883 = vpop.f32.mrb[0].mxu0
      %v884 = vadd.f32 %v757, %v883
      %v885 = vpop.f32.mrb[0].mxu0
      %v886 = vpop.f32.mrb[0].mxu0
      %v887 = vadd.f32 %v760, %v886
      %v888 = vpop.f32.mrb[0].mxu0
      %889 = vmatprep.mubr.bf16.mxu0 0
      %890 = vmatmul.mubr.bf16.gmra.mrb[0].mxu0 %v799
      %v891 = vpop.f32.mrb[0].mxu0
      %v892 = vadd.f32 %v765, %v891
      %v893 = vpop.f32.mrb[0].mxu0
      %v894 = vpop.f32.mrb[0].mxu0
      %v895 = vadd.f32 %v768, %v894
      %v896 = vpop.f32.mrb[0].mxu0
      %897 = vdwg.mxu0
      %v899 = vlaneseq
      %v900 = vshrl.u32 %v899, 7
      %v901 = vsub.s32 0, %v900
      %v902 = vrot.slane %v311, %v901
      %v904 = vadd.f32 %v836, %v902
      %v905 = vadd.f32 %v839, %v902
      %v906 = vadd.f32 %v844, %v902
      %v907 = vadd.f32 %v847, %v902
      %v908 = vadd.f32 %v852, %v902
      %v909 = vadd.f32 %v855, %v902
      %v910 = vadd.f32 %v860, %v902
      %v911 = vadd.f32 %v863, %v902
      %v912 = vadd.f32 %v868, %v902
      %v913 = vadd.f32 %v871, %v902
      %v914 = vadd.f32 %v876, %v902
      %v915 = vadd.f32 %v879, %v902
      %v916 = vadd.f32 %v884, %v902
      %v917 = vadd.f32 %v887, %v902
      %v918 = vadd.f32 %v892, %v902
      %v919 = vadd.f32 %v895, %v902
      %v920 = vmax.f32 %v904, 0.0
      %v921 = vmax.f32 %v905, 0.0
      %v922 = vmax.f32 %v906, 0.0
      %v923 = vmax.f32 %v907, 0.0
      %v924 = vmax.f32 %v908, 0.0
      %v925 = vmax.f32 %v909, 0.0
      %v926 = vmax.f32 %v910, 0.0
      %v927 = vmax.f32 %v911, 0.0
      %v928 = vmax.f32 %v912, 0.0
      %v929 = vmax.f32 %v913, 0.0
      %v930 = vmax.f32 %v914, 0.0
      %v931 = vmax.f32 %v915, 0.0
      %v932 = vmax.f32 %v916, 0.0
      %v933 = vmax.f32 %v917, 0.0
      %v934 = vmax.f32 %v918, 0.0
      %v935 = vmax.f32 %v919, 0.0
      %v936 = vpack.c.bf16 %v921, %v920
      %v937 = vpack.c.bf16 %v923, %v922
      %v938 = vpack.c.bf16 %v925, %v924
      %v939 = vpack.c.bf16 %v927, %v926
      %v940 = vpack.c.bf16 %v929, %v928
      %v941 = vpack.c.bf16 %v931, %v930
      %v942 = vpack.c.bf16 %v933, %v932
      %v943 = vpack.c.bf16 %v935, %v934
      %v944 = vld [vmem:[%s5] sm:$0xf]
      %v945 = vld [vmem:[%s5 + $0x4] sm:$0xf]
      %v946 = vld [vmem:[%s5 + $0x8] sm:$0xf]
      %v947 = vld [vmem:[%s5 + $0xc] sm:$0xf]
      %v948 = vld [vmem:[%s5 + $0x10] sm:$0xf]
      %v949 = vld [vmem:[%s5 + $0x14] sm:$0xf]
      %v950 = vld [vmem:[%s5 + $0x18] sm:$0xf]
      %v951 = vld [vmem:[%s5 + $0x1c] sm:$0xf]
      %v952 = vld [vmem:[%s5 + $0x20] sm:$0xf]
      %v953 = vld [vmem:[%s5 + $0x24] sm:$0xf]
      %v954 = vld [vmem:[%s5 + $0x28] sm:$0xf]
      %v955 = vld [vmem:[%s5 + $0x2c] sm:$0xf]
      %v956 = vld [vmem:[%s5 + $0x30] sm:$0xf]
      %v957 = vld [vmem:[%s5 + $0x34] sm:$0xf]
      %v958 = vld [vmem:[%s5 + $0x38] sm:$0xf]
      %v959 = vld [vmem:[%s5 + $0x3c] sm:$0xf]
      %v961 = vlaneseq
      %v962 = vshrl.u32 %v961, 7
      %v963 = vsub.s32 0, %v962
      %v964 = vrot.slane %v312, %v963
      %v982 = vunpack.c.l.b16 %v944
      %v983 = vunpack.c.l.b16 %v945
      %v984 = vunpack.c.l.b16 %v946
      %v985 = vunpack.c.l.b16 %v947
      %v986 = vunpack.c.l.b16 %v948
      %v987 = vunpack.c.l.b16 %v949
      %v988 = vunpack.c.l.b16 %v950
      %v989 = vunpack.c.l.b16 %v951
      %v990 = vunpack.c.l.b16 %v952
      %v991 = vunpack.c.l.b16 %v953
      %v992 = vunpack.c.l.b16 %v954
      %v993 = vunpack.c.l.b16 %v955
      %v994 = vunpack.c.l.b16 %v956
      %v995 = vunpack.c.l.b16 %v957
      %v996 = vunpack.c.l.b16 %v958
      %v997 = vunpack.c.l.b16 %v959
      %v998 = vpack.c.b16 %v983, %v982
      %v999 = vpack.c.b16 %v985, %v984
      %v1000 = vpack.c.b16 %v987, %v986
      %v1001 = vpack.c.b16 %v989, %v988
      %v1002 = vpack.c.b16 %v991, %v990
      %v1003 = vpack.c.b16 %v993, %v992
      %v1004 = vpack.c.b16 %v995, %v994
      %v1005 = vpack.c.b16 %v997, %v996
      %1014 = vmatprep.subr.bf16.mxu0 0
      %1015 = vmatpush1.bf16.msra.mxu0 %v998
      %1016 = vmatprep.subr.bf16.mxu0 0
      %1017 = vmatpush1.bf16.msra.mxu0 %v999
      %1018 = vmatprep.subr.bf16.mxu0 0
      %1019 = vmatpush1.bf16.msra.mxu0 %v1000
      %1020 = vmatprep.subr.bf16.mxu0 0
      %1021 = vmatpush1.bf16.msra.mxu0 %v1001
      %1022 = vmatprep.subr.bf16.mxu0 0
      %1023 = vmatpush1.bf16.msra.mxu0 %v1002
      %1024 = vmatprep.subr.bf16.mxu0 0
      %1025 = vmatpush1.bf16.msra.mxu0 %v1003
      %1026 = vmatprep.subr.bf16.mxu0 0
      %1027 = vmatpush1.bf16.msra.mxu0 %v1004
      %1028 = vmatprep.subr.bf16.mxu0 0
      %1029 = vmatpush1.bf16.msra.mxu0 %v1005
      %1030 = vmatprep.subr.bf16.mxu0 0
      %1031 = vmatpush1.bf16.msra.mxu0 0
      %1032 = vmatprep.subr.bf16.mxu0 0
      %1033 = vmatpush1.bf16.msra.mxu0 0
      %1034 = vmatprep.subr.bf16.mxu0 0
      %1035 = vmatpush1.bf16.msra.mxu0 0
      %1036 = vmatprep.subr.bf16.mxu0 0
      %1037 = vmatpush1.bf16.msra.mxu0 0
      %1038 = vmatprep.subr.bf16.mxu0 0
      %1039 = vmatpush1.bf16.msra.mxu0 0
      %1040 = vmatprep.subr.bf16.mxu0 0
      %1041 = vmatpush1.bf16.msra.mxu0 0
      %1042 = vmatprep.subr.bf16.mxu0 0
      %1043 = vmatpush1.bf16.msra.mxu0 0
      %1044 = vmatprep.subr.bf16.mxu0 0
      %1045 = vmatpush1.bf16.msra.mxu0 0
      %1046 = vmatprep.mubr.bf16.mxu0 0
      %1047 = vmatmul.mubr.bf16.gmra.mrb[0].mxu0 %v936
      %v1048 = vpop.f32.mrb[0].mxu0
      %v1049 = vadd.f32 %v964, %v1048
      %v1050 = vpop.f32.mrb[0].mxu0
      %v1051 = vpop.f32.mrb[0].mxu0
      %v1052 = vadd.f32 %v964, %v1051
      %v1053 = vpop.f32.mrb[0].mxu0
      %1054 = vmatprep.mubr.bf16.mxu0 0
      %1055 = vmatmul.mubr.bf16.gmra.mrb[0].mxu0 %v937
      %v1056 = vpop.f32.mrb[0].mxu0
      %v1057 = vadd.f32 %v964, %v1056
      %v1058 = vpop.f32.mrb[0].mxu0
      %v1059 = vpop.f32.mrb[0].mxu0
      %v1060 = vadd.f32 %v964, %v1059
      %v1061 = vpop.f32.mrb[0].mxu0
      %1062 = vmatprep.mubr.bf16.mxu0 0
      %1063 = vmatmul.mubr.bf16.gmra.mrb[0].mxu0 %v938
      %v1064 = vpop.f32.mrb[0].mxu0
      %v1065 = vadd.f32 %v964, %v1064
      %v1066 = vpop.f32.mrb[0].mxu0
      %v1067 = vpop.f32.mrb[0].mxu0
      %v1068 = vadd.f32 %v964, %v1067
      %v1069 = vpop.f32.mrb[0].mxu0
      %1070 = vmatprep.mubr.bf16.mxu0 0
      %1071 = vmatmul.mubr.bf16.gmra.mrb[0].mxu0 %v939
      %v1072 = vpop.f32.mrb[0].mxu0
      %v1073 = vadd.f32 %v964, %v1072
      %v1074 = vpop.f32.mrb[0].mxu0
      %v1075 = vpop.f32.mrb[0].mxu0
      %v1076 = vadd.f32 %v964, %v1075
      %v1077 = vpop.f32.mrb[0].mxu0
      %1078 = vmatprep.mubr.bf16.mxu0 0
      %1079 = vmatmul.mubr.bf16.gmra.mrb[0].mxu0 %v940
      %v1080 = vpop.f32.mrb[0].mxu0
      %v1081 = vadd.f32 %v964, %v1080
      %v1082 = vpop.f32.mrb[0].mxu0
      %v1083 = vpop.f32.mrb[0].mxu0
      %v1084 = vadd.f32 %v964, %v1083
      %v1085 = vpop.f32.mrb[0].mxu0
      %1086 = vmatprep.mubr.bf16.mxu0 0
      %1087 = vmatmul.mubr.bf16.gmra.mrb[0].mxu0 %v941
      %v1088 = vpop.f32.mrb[0].mxu0
      %v1089 = vadd.f32 %v964, %v1088
      %v1090 = vpop.f32.mrb[0].mxu0
      %v1091 = vpop.f32.mrb[0].mxu0
      %v1092 = vadd.f32 %v964, %v1091
      %v1093 = vpop.f32.mrb[0].mxu0
      %1094 = vmatprep.mubr.bf16.mxu0 0
      %1095 = vmatmul.mubr.bf16.gmra.mrb[0].mxu0 %v942
      %v1096 = vpop.f32.mrb[0].mxu0
      %v1097 = vadd.f32 %v964, %v1096
      %v1098 = vpop.f32.mrb[0].mxu0
      %v1099 = vpop.f32.mrb[0].mxu0
      %v1100 = vadd.f32 %v964, %v1099
      %v1101 = vpop.f32.mrb[0].mxu0
      %1102 = vmatprep.mubr.bf16.mxu0 0
      %1103 = vmatmul.mubr.bf16.gmra.mrb[0].mxu0 %v943
      %v1104 = vpop.f32.mrb[0].mxu0
      %v1105 = vadd.f32 %v964, %v1104
      %v1106 = vpop.f32.mrb[0].mxu0
      %v1107 = vpop.f32.mrb[0].mxu0
      %v1108 = vadd.f32 %v964, %v1107
      %v1109 = vpop.f32.mrb[0].mxu0
      %1110 = vdwg.mxu0
      %v1111 = vmax.f32 %v1049, 0.0
      %v1112 = vmax.f32 %v1052, 0.0
      %v1113 = vmax.f32 %v1057, 0.0
      %v1114 = vmax.f32 %v1060, 0.0
      %v1115 = vmax.f32 %v1065, 0.0
      %v1116 = vmax.f32 %v1068, 0.0
      %v1117 = vmax.f32 %v1073, 0.0
      %v1118 = vmax.f32 %v1076, 0.0
      %v1119 = vmax.f32 %v1081, 0.0
      %v1120 = vmax.f32 %v1084, 0.0
      %v1121 = vmax.f32 %v1089, 0.0
      %v1122 = vmax.f32 %v1092, 0.0
      %v1123 = vmax.f32 %v1097, 0.0
      %v1124 = vmax.f32 %v1100, 0.0
      %v1125 = vmax.f32 %v1105, 0.0
      %v1126 = vmax.f32 %v1108, 0.0
      %v1128 = vlaneseq
      %v1129 = vshrl.u32 %v1128, 7
      %v1130 = vsub.s32 0, %v1129
      %v1131 = vrot.slane %v313, %v1130
      %v1133 = vmul.f32 %v1111, %v1131
      %v1134 = vmul.f32 %v1112, %v1131
      %v1135 = vmul.f32 %v1113, %v1131
      %v1136 = vmul.f32 %v1114, %v1131
      %v1137 = vmul.f32 %v1115, %v1131
      %v1138 = vmul.f32 %v1116, %v1131
      %v1139 = vmul.f32 %v1117, %v1131
      %v1140 = vmul.f32 %v1118, %v1131
      %v1141 = vmul.f32 %v1119, %v1131
      %v1142 = vmul.f32 %v1120, %v1131
      %v1143 = vmul.f32 %v1121, %v1131
      %v1144 = vmul.f32 %v1122, %v1131
      %v1145 = vmul.f32 %v1123, %v1131
      %v1146 = vmul.f32 %v1124, %v1131
      %v1147 = vmul.f32 %v1125, %v1131
      %v1148 = vmul.f32 %v1126, %v1131
      %1149 = vadd.xlane.f32.xlu0 %v1133
      %v1150 = vpop.xlane.xlu0 %1149
      %1151 = vadd.xlane.f32.xlu0 %v1134
      %v1152 = vpop.xlane.xlu0 %1151
      %1153 = vadd.xlane.f32.xlu0 %v1135
      %v1154 = vpop.xlane.xlu0 %1153
      %1155 = vadd.xlane.f32.xlu0 %v1136
      %v1156 = vpop.xlane.xlu0 %1155
      %1157 = vadd.xlane.f32.xlu0 %v1137
      %v1158 = vpop.xlane.xlu0 %1157
      %1159 = vadd.xlane.f32.xlu0 %v1138
      %v1160 = vpop.xlane.xlu0 %1159
      %1161 = vadd.xlane.f32.xlu0 %v1139
      %v1162 = vpop.xlane.xlu0 %1161
      %1163 = vadd.xlane.f32.xlu0 %v1140
      %v1164 = vpop.xlane.xlu0 %1163
      %1165 = vadd.xlane.f32.xlu0 %v1141
      %v1166 = vpop.xlane.xlu0 %1165
      %1167 = vadd.xlane.f32.xlu0 %v1142
      %v1168 = vpop.xlane.xlu0 %1167
      %1169 = vadd.xlane.f32.xlu0 %v1143
      %v1170 = vpop.xlane.xlu0 %1169
      %1171 = vadd.xlane.f32.xlu0 %v1144
      %v1172 = vpop.xlane.xlu0 %1171
      %1173 = vadd.xlane.f32.xlu0 %v1145
      %v1174 = vpop.xlane.xlu0 %1173
      %1175 = vadd.xlane.f32.xlu0 %v1146
      %v1176 = vpop.xlane.xlu0 %1175
      %1177 = vadd.xlane.f32.xlu0 %v1147
      %v1178 = vpop.xlane.xlu0 %1177
      %1179 = vadd.xlane.f32.xlu0 %v1148
      %v1180 = vpop.xlane.xlu0 %1179
      %v1181 = vadd.f32 %v392, %v536
      %v1182 = vadd.f32 %v393, %v537
      %v1183 = vadd.f32 %v394, %v538
      %v1184 = vadd.f32 %v395, %v539
      %v1185 = vadd.f32 %v396, %v540
      %v1186 = vadd.f32 %v397, %v541
      %v1187 = vadd.f32 %v398, %v542
      %v1188 = vadd.f32 %v399, %v543
      %v1189 = vadd.f32 %v400, %v544
      %v1190 = vadd.f32 %v401, %v545
      %v1191 = vadd.f32 %v402, %v546
      %v1192 = vadd.f32 %v403, %v547
      %v1193 = vadd.f32 %v404, %v548
      %v1194 = vadd.f32 %v405, %v549
      %v1195 = vadd.f32 %v406, %v550
      %v1196 = vadd.f32 %v407, %v551
      %v1197 = vadd.f32 %v1181, %v1150
      %v1198 = vadd.f32 %v1182, %v1152
      %v1199 = vadd.f32 %v1183, %v1154
      %v1200 = vadd.f32 %v1184, %v1156
      %v1201 = vadd.f32 %v1185, %v1158
      %v1202 = vadd.f32 %v1186, %v1160
      %v1203 = vadd.f32 %v1187, %v1162
      %v1204 = vadd.f32 %v1188, %v1164
      %v1205 = vadd.f32 %v1189, %v1166
      %v1206 = vadd.f32 %v1190, %v1168
      %v1207 = vadd.f32 %v1191, %v1170
      %v1208 = vadd.f32 %v1192, %v1172
      %v1209 = vadd.f32 %v1193, %v1174
      %v1210 = vadd.f32 %v1194, %v1176
      %v1211 = vadd.f32 %v1195, %v1178
      %v1212 = vadd.f32 %v1196, %v1180
      %v1213 = vxor.u32 %v1197, 2147483648
      %v1214 = vxor.u32 %v1198, 2147483648
      %v1215 = vxor.u32 %v1199, 2147483648
      %v1216 = vxor.u32 %v1200, 2147483648
      %v1217 = vxor.u32 %v1201, 2147483648
      %v1218 = vxor.u32 %v1202, 2147483648
      %v1219 = vxor.u32 %v1203, 2147483648
      %v1220 = vxor.u32 %v1204, 2147483648
      %v1221 = vxor.u32 %v1205, 2147483648
      %v1222 = vxor.u32 %v1206, 2147483648
      %v1223 = vxor.u32 %v1207, 2147483648
      %v1224 = vxor.u32 %v1208, 2147483648
      %v1225 = vxor.u32 %v1209, 2147483648
      %v1226 = vxor.u32 %v1210, 2147483648
      %v1227 = vxor.u32 %v1211, 2147483648
      %v1228 = vxor.u32 %v1212, 2147483648
      %v1229 = vmul.f32 %v1213, 1.442695
      %v1230 = vpow.pop %v1229
      %v1231 = vmul.f32 %v1214, 1.442695
      %v1232 = vpow.pop %v1231
      %v1233 = vmul.f32 %v1215, 1.442695
      %v1234 = vpow.pop %v1233
      %v1235 = vmul.f32 %v1216, 1.442695
      %v1236 = vpow.pop %v1235
      %v1237 = vmul.f32 %v1217, 1.442695
      %v1238 = vpow.pop %v1237
      %v1239 = vmul.f32 %v1218, 1.442695
      %v1240 = vpow.pop %v1239
      %v1241 = vmul.f32 %v1219, 1.442695
      %v1242 = vpow.pop %v1241
      %v1243 = vmul.f32 %v1220, 1.442695
      %v1244 = vpow.pop %v1243
      %v1245 = vmul.f32 %v1221, 1.442695
      %v1246 = vpow.pop %v1245
      %v1247 = vmul.f32 %v1222, 1.442695
      %v1248 = vpow.pop %v1247
      %v1249 = vmul.f32 %v1223, 1.442695
      %v1250 = vpow.pop %v1249
      %v1251 = vmul.f32 %v1224, 1.442695
      %v1252 = vpow.pop %v1251
      %v1253 = vmul.f32 %v1225, 1.442695
      %v1254 = vpow.pop %v1253
      %v1255 = vmul.f32 %v1226, 1.442695
      %v1256 = vpow.pop %v1255
      %v1257 = vmul.f32 %v1227, 1.442695
      %v1258 = vpow.pop %v1257
      %v1259 = vmul.f32 %v1228, 1.442695
      %v1260 = vpow.pop %v1259
      %v1261 = vadd.f32 %v1230, 1.0
      %v1262 = vadd.f32 %v1232, 1.0
      %v1263 = vadd.f32 %v1234, 1.0
      %v1264 = vadd.f32 %v1236, 1.0
      %v1265 = vadd.f32 %v1238, 1.0
      %v1266 = vadd.f32 %v1240, 1.0
      %v1267 = vadd.f32 %v1242, 1.0
      %v1268 = vadd.f32 %v1244, 1.0
      %v1269 = vadd.f32 %v1246, 1.0
      %v1270 = vadd.f32 %v1248, 1.0
      %v1271 = vadd.f32 %v1250, 1.0
      %v1272 = vadd.f32 %v1252, 1.0
      %v1273 = vadd.f32 %v1254, 1.0
      %v1274 = vadd.f32 %v1256, 1.0
      %v1275 = vadd.f32 %v1258, 1.0
      %v1276 = vadd.f32 %v1260, 1.0
      %v1277 = vrcp.pop %v1261
      %v1278 = vmul.f32 1.0, %v1277
      %v1279 = vrcp.pop %v1262
      %v1280 = vmul.f32 1.0, %v1279
      %v1281 = vrcp.pop %v1263
      %v1282 = vmul.f32 1.0, %v1281
      %v1283 = vrcp.pop %v1264
      %v1284 = vmul.f32 1.0, %v1283
      %v1285 = vrcp.pop %v1265
      %v1286 = vmul.f32 1.0, %v1285
      %v1287 = vrcp.pop %v1266
      %v1288 = vmul.f32 1.0, %v1287
      %v1289 = vrcp.pop %v1267
      %v1290 = vmul.f32 1.0, %v1289
      %v1291 = vrcp.pop %v1268
      %v1292 = vmul.f32 1.0, %v1291
      %v1293 = vrcp.pop %v1269
      %v1294 = vmul.f32 1.0, %v1293
      %v1295 = vrcp.pop %v1270
      %v1296 = vmul.f32 1.0, %v1295
      %v1297 = vrcp.pop %v1271
      %v1298 = vmul.f32 1.0, %v1297
      %v1299 = vrcp.pop %v1272
      %v1300 = vmul.f32 1.0, %v1299
      %v1301 = vrcp.pop %v1273
      %v1302 = vmul.f32 1.0, %v1301
      %v1303 = vrcp.pop %v1274
      %v1304 = vmul.f32 1.0, %v1303
      %v1305 = vrcp.pop %v1275
      %v1306 = vmul.f32 1.0, %v1305
      %v1307 = vrcp.pop %v1276
      %v1308 = vmul.f32 1.0, %v1307
      %vm1309 = vcmask 7168
      %1310 = vst.msk [vmem:[%s275] sm:$0xff] %vm1309, %v1278
      %1311 = vst.msk [vmem:[%s275 + $0x8] sm:$0xff] %vm1309, %v1280
      %1312 = vst.msk [vmem:[%s275 + $0x10] sm:$0xff] %vm1309, %v1282
      %1313 = vst.msk [vmem:[%s275 + $0x18] sm:$0xff] %vm1309, %v1284
      %1314 = vst.msk [vmem:[%s275 + $0x20] sm:$0xff] %vm1309, %v1286
      %1315 = vst.msk [vmem:[%s275 + $0x28] sm:$0xff] %vm1309, %v1288
      %1316 = vst.msk [vmem:[%s275 + $0x30] sm:$0xff] %vm1309, %v1290
      %1317 = vst.msk [vmem:[%s275 + $0x38] sm:$0xff] %vm1309, %v1292
      %1318 = vst.msk [vmem:[%s275 + $0x40] sm:$0xff] %vm1309, %v1294
      %1319 = vst.msk [vmem:[%s275 + $0x48] sm:$0xff] %vm1309, %v1296
      %1320 = vst.msk [vmem:[%s275 + $0x50] sm:$0xff] %vm1309, %v1298
      %1321 = vst.msk [vmem:[%s275 + $0x58] sm:$0xff] %vm1309, %v1300
      %1322 = vst.msk [vmem:[%s275 + $0x60] sm:$0xff] %vm1309, %v1302
      %1323 = vst.msk [vmem:[%s275 + $0x68] sm:$0xff] %vm1309, %v1304
      %1324 = vst.msk [vmem:[%s275 + $0x70] sm:$0xff] %vm1309, %v1306
      %1325 = vst.msk [vmem:[%s275 + $0x78] sm:$0xff] %vm1309, %v1308
      %s1326 = smul.u32 16, %s17
      %p1327 = scmp.lt.s32.totalorder %s1326, 31
      %s1328 = scalar_select %p1327, %s1326, 31
      %s1329 = smul.addr %s1328, 8
      %s1330 = scalar_lea.vmem %s6, %s1329
      // Predicated region
      $region45: #{tpu_custom_call.1} parent=43 // pred_check
        %p1331 = pneg %p171
      $region46: #{tpu_custom_call.1} parent=43 // pred_check_branch
        %1333 = sbr.rel (%p1331) target = $region48
      $region47: #{tpu_custom_call.1} parent=43 // pred_region
        %s1334 = smul.u32 16, %s17
      $region48: #{tpu_custom_call.1} parent=43 // pred_fallthru
        _
    $region44: #{tpu_custom_call.1} parent=5 // pred_fallthru
      _
    %p1335 = scmp.le.s32.totalorder 2, %s12
    // Predicated region
    $region49: #{tpu_custom_call.1} parent=5 // pred_check
      %p1336 = pneg %p1335
    $region50: #{tpu_custom_call.1} parent=5 // pred_check_branch
      %1338 = sbr.rel (%p1336) target = $region52
    $region51: #{tpu_custom_call.1} parent=5 // pred_region
      %s1339 = ssub.s32 %s12, 2
      // Predicated region
      $region53: #{tpu_custom_call.1} parent=51 // pred_check
        %p1340 = pneg %p177
      $region54: #{tpu_custom_call.1} parent=51 // pred_check_branch
        %1342 = sbr.rel (%p1340) target = $region56
      $region55: #{tpu_custom_call.1} parent=51 // pred_region
        %s1343 = smul.u32 16, %s18
        %p1344 = scmp.lt.s32.totalorder %s1343, 31
        %s1345 = scalar_select %p1344, %s1343, 31
        %s1346 = smul.addr %s1345, 8
        %s1347 = scalar_lea.vmem %s6, %s1346
      $region56: #{tpu_custom_call.1} parent=51 // pred_fallthru
        _
    $region52: #{tpu_custom_call.1} parent=5 // pred_fallthru
      _
  $region6: #{tpu_custom_call.1} parent=0 // loop_footer
    %s16 = sadd.s32 1, %s12
  $region7: #{tpu_custom_call.1} parent=0 // loop_footer_branch
    %11 = sbr.rel target = $region3
  $region8: #{tpu_custom_call.1} parent=0 // loop_exit
    _

// kernel: tpu_custom_call.1
$region0: #{tpu_custom_call.1}
  #allocation0 [shape = 'u32[]', space=smem, size = 0x4, offset = 0x4, fixed_abs, tag = 'smem constant byte address 0x4 - core index']
  #allocation1 [shape = 'u32[144,128]{1,0:T(1,128)}', space=vmem, size = 0x12000, scoped, tag = 'internal scratch']
  %s0 = inlined_call_operand.vmem [shape: f32[256,16], index: 0, kind: input, shape index: {}]
  %s1 = inlined_call_operand.vmem [shape: bf16[256,128], index: 1, kind: input, shape index: {}]
  %s2 = inlined_call_operand.vmem [shape: f32[1,640], index: 2, kind: input, shape index: {}]
  %s3 = inlined_call_operand.vmem [shape: bf16[16,128], index: 3, kind: input, shape index: {}]
  %s4 = inlined_call_operand.vmem [shape: bf16[128,128], index: 4, kind: input, shape index: {}]
  %s5 = inlined_call_operand.vmem [shape: bf16[128,128], index: 5, kind: input, shape index: {}]
  %s6 = inlined_call_operand.vmem [shape: f32[256,1], index: 6, kind: output, shape index: {}]
  %s7 = sld [smem:[#allocation0]]
  $region57: #{tpu_custom_call.1} parent=0
    _
  %s9 = ssub.s32 1, %s7
  %s10 = scalar_select 0, %s9, %s7
  loop: start=0, step=1, limit=4
  $region2: #{tpu_custom_call.1} parent=0 // loop_pre_header
    _
  $region3: #{tpu_custom_call.1} parent=0 // loop_header
    %s12 = sphi 0, %s16
    %p13 = scmp.ge.s32.totalorder %s12, 4
    %s22 = sphi 0, %s24
    %s25 = sphi 0, %s22
    %s26 = sphi 0, %s25
    %s42 = sphi 0, %s26
    %s48 = sphi 0, %s50
    %s51 = sphi 0, %s48
    %s52 = sphi 0, %s51
    %s68 = sphi 0, %s52
    %s72 = sphi 0, %s72
    %s74 = sphi 0, %s72
    %s75 = sphi 0, %s74
    %s89 = sphi 0, %s75
    %s93 = sphi 0, %s93
    %s95 = sphi 0, %s93
    %s96 = sphi 0, %s95
    %s110 = sphi 0, %s96
    %s114 = sphi 0, %s114
    %s116 = sphi 0, %s114
    %s117 = sphi 0, %s116
    %s131 = sphi 0, %s117
    %s135 = sphi 0, %s135
    %s137 = sphi 0, %s135
    %s138 = sphi 0, %s137
    %s152 = sphi 0, %s138
    %s158 = sphi 0, %s160
    %s161 = sphi 0, %s158
    %s162 = sphi 0, %s161
    %s178 = sphi 0, %s162
  $region4: #{tpu_custom_call.1} parent=0 // loop_header_branch
    %15 = sbr.rel (%p13) target = $region8
  $region5: #{tpu_custom_call.1} parent=0 // loop_body
    %s17 = ssub.s32 %s12, 1
    %s18 = ssub.s32 %s12, 2
    %s19 = sadd.s32 %s12, 1
    %s20 = ssub.s32 %s12, %s19
    %p21 = scmp.eq.s32.totalorder %s20, 0
    %s23 = sadd.s32 %s22, 1
    %s24 = scalar_select %p21, %s22, %s23
    %p27 = pneg %p21
    %p28 = scmp.eq.s32.totalorder %s12, 1
    %p29 = por %p27, %p28
    %p30 = scmp.ne.s32.totalorder %s22, %s25
    %p31 = scmp.eq.s32.totalorder %s12, 0
    %p32 = por %p30, %p31
    %p33 = scmp.ne.s32.totalorder %s22, %s25
    %p34 = scmp.eq.s32.totalorder %s17, 1
    %p35 = por %p33, %p34
    %p36 = scmp.ne.s32.totalorder %s25, %s26
    %p37 = scmp.eq.s32.totalorder %s17, 0
    %p38 = por %p36, %p37
    %p39 = scmp.ne.s32.totalorder %s25, %s26
    %p40 = scmp.eq.s32.totalorder %s18, 1
    %p41 = por %p39, %p40
    %p43 = scmp.ne.s32.totalorder %s26, %s42
    %p44 = scmp.eq.s32.totalorder %s18, 0
    %p45 = por %p43, %p44
    %s46 = ssub.s32 %s12, %s19
    %p47 = scmp.eq.s32.totalorder %s46, 0
    %s49 = sadd.s32 %s48, 1
    %s50 = scalar_select %p47, %s48, %s49
    %p53 = pneg %p47
    %p54 = scmp.eq.s32.totalorder %s12, 1
    %p55 = por %p53, %p54
    %p56 = scmp.ne.s32.totalorder %s48, %s51
    %p57 = scmp.eq.s32.totalorder %s12, 0
    %p58 = por %p56, %p57
    %p59 = scmp.ne.s32.totalorder %s48, %s51
    %p60 = scmp.eq.s32.totalorder %s17, 1
    %p61 = por %p59, %p60
    %p62 = scmp.ne.s32.totalorder %s51, %s52
    %p63 = scmp.eq.s32.totalorder %s17, 0
    %p64 = por %p62, %p63
    %p65 = scmp.ne.s32.totalorder %s51, %s52
    %p66 = scmp.eq.s32.totalorder %s18, 1
    %p67 = por %p65, %p66
    %p69 = scmp.ne.s32.totalorder %s52, %s68
    %p70 = scmp.eq.s32.totalorder %s18, 0
    %p71 = por %p69, %p70
    %s73 = sadd.s32 %s72, 1
    %p76 = scmp.eq.s32.totalorder %s12, 1
    %p77 = scmp.ne.s32.totalorder %s72, %s74
    %p78 = scmp.eq.s32.totalorder %s12, 0
    %p79 = por %p77, %p78
    %p80 = scmp.ne.s32.totalorder %s72, %s74
    %p81 = scmp.eq.s32.totalorder %s17, 1
    %p82 = por %p80, %p81
    %p83 = scmp.ne.s32.totalorder %s74, %s75
    %p84 = scmp.eq.s32.totalorder %s17, 0
    %p85 = por %p83, %p84
    %p86 = scmp.ne.s32.totalorder %s74, %s75
    %p87 = scmp.eq.s32.totalorder %s18, 1
    %p88 = por %p86, %p87
    %p90 = scmp.ne.s32.totalorder %s75, %s89
    %p91 = scmp.eq.s32.totalorder %s18, 0
    %p92 = por %p90, %p91
    %s94 = sadd.s32 %s93, 1
    %p97 = scmp.eq.s32.totalorder %s12, 1
    %p98 = scmp.ne.s32.totalorder %s93, %s95
    %p99 = scmp.eq.s32.totalorder %s12, 0
    %p100 = por %p98, %p99
    %p101 = scmp.ne.s32.totalorder %s93, %s95
    %p102 = scmp.eq.s32.totalorder %s17, 1
    %p103 = por %p101, %p102
    %p104 = scmp.ne.s32.totalorder %s95, %s96
    %p105 = scmp.eq.s32.totalorder %s17, 0
    %p106 = por %p104, %p105
    %p107 = scmp.ne.s32.totalorder %s95, %s96
    %p108 = scmp.eq.s32.totalorder %s18, 1
    %p109 = por %p107, %p108
    %p111 = scmp.ne.s32.totalorder %s96, %s110
    %p112 = scmp.eq.s32.totalorder %s18, 0
    %p113 = por %p111, %p112
    %s115 = sadd.s32 %s114, 1
    %p118 = scmp.eq.s32.totalorder %s12, 1
    %p119 = scmp.ne.s32.totalorder %s114, %s116
    %p120 = scmp.eq.s32.totalorder %s12, 0
    %p121 = por %p119, %p120
    %p122 = scmp.ne.s32.totalorder %s114, %s116
    %p123 = scmp.eq.s32.totalorder %s17, 1
    %p124 = por %p122, %p123
    %p125 = scmp.ne.s32.totalorder %s116, %s117
    %p126 = scmp.eq.s32.totalorder %s17, 0
    %p127 = por %p125, %p126
    %p128 = scmp.ne.s32.totalorder %s116, %s117
    %p129 = scmp.eq.s32.totalorder %s18, 1
    %p130 = por %p128, %p129
    %p132 = scmp.ne.s32.totalorder %s117, %s131
    %p133 = scmp.eq.s32.totalorder %s18, 0
    %p134 = por %p132, %p133
    %s136 = sadd.s32 %s135, 1
    %p139 = scmp.eq.s32.totalorder %s12, 1
    %p140 = scmp.ne.s32.totalorder %s135, %s137
    %p141 = scmp.eq.s32.totalorder %s12, 0
    %p142 = por %p140, %p141
    %p143 = scmp.ne.s32.totalorder %s135, %s137
    %p144 = scmp.eq.s32.totalorder %s17, 1
    %p145 = por %p143, %p144
    %p146 = scmp.ne.s32.totalorder %s137, %s138
    %p147 = scmp.eq.s32.totalorder %s17, 0
    %p148 = por %p146, %p147
    %p149 = scmp.ne.s32.totalorder %s137, %s138
    %p150 = scmp.eq.s32.totalorder %s18, 1
    %p151 = por %p149, %p150
    %p153 = scmp.ne.s32.totalorder %s138, %s152
    %p154 = scmp.eq.s32.totalorder %s18, 0
    %p155 = por %p153, %p154
    %s156 = ssub.s32 %s12, %s19
    %p157 = scmp.eq.s32.totalorder %s156, 0
    %s159 = sadd.s32 %s158, 1
    %s160 = scalar_select %p157, %s158, %s159
    %p163 = pneg %p157
    %p164 = scmp.eq.s32.totalorder %s12, 1
    %p165 = por %p163, %p164
    %p166 = scmp.ne.s32.totalorder %s158, %s161
    %p167 = scmp.eq.s32.totalorder %s12, 0
    %p168 = por %p166, %p167
    %p169 = scmp.ne.s32.totalorder %s158, %s161
    %p170 = scmp.eq.s32.totalorder %s17, 1
    %p171 = por %p169, %p170
    %p172 = scmp.ne.s32.totalorder %s161, %s162
    %p173 = scmp.eq.s32.totalorder %s17, 0
    %p174 = por %p172, %p173
    %p175 = scmp.ne.s32.totalorder %s161, %s162
    %p176 = scmp.eq.s32.totalorder %s18, 1
    %p177 = por %p175, %p176
    %p179 = scmp.ne.s32.totalorder %s162, %s178
    %p180 = scmp.eq.s32.totalorder %s18, 0
    %p181 = por %p179, %p180
    %p182 = scmp.le.s32.totalorder 1, %s12
    %p183 = scmp.lt.s32.totalorder %s12, 3
    %p184 = pnand %p182, %p183
    %p185 = pneg %p184
    // Predicated region
    $region9: #{tpu_custom_call.1} parent=5 // pred_check
      _
    $region10: #{tpu_custom_call.1} parent=5 // pred_check_branch
      %187 = sbr.rel (%p184) target = $region12
    $region11: #{tpu_custom_call.1} parent=5 // pred_region
      %s188 = ssub.s32 %s12, 1
      // Predicated region
      $region13: #{tpu_custom_call.1} parent=11 // pred_check
        %p189 = pneg %p85
      $region14: #{tpu_custom_call.1} parent=11 // pred_check_branch
        %191 = sbr.rel (%p189) target = $region16
      $region15: #{tpu_custom_call.1} parent=11 // pred_region
        _
      $region16: #{tpu_custom_call.1} parent=11 // pred_fallthru
        _
      // Predicated region
      $region17: #{tpu_custom_call.1} parent=11 // pred_check
        %p192 = pneg %p106
      $region18: #{tpu_custom_call.1} parent=11 // pred_check_branch
        %194 = sbr.rel (%p192) target = $region20
      $region19: #{tpu_custom_call.1} parent=11 // pred_region
        _
      $region20: #{tpu_custom_call.1} parent=11 // pred_fallthru
        _
      // Predicated region
      $region21: #{tpu_custom_call.1} parent=11 // pred_check
        %p195 = pneg %p127
      $region22: #{tpu_custom_call.1} parent=11 // pred_check_branch
        %197 = sbr.rel (%p195) target = $region24
      $region23: #{tpu_custom_call.1} parent=11 // pred_region
        _
      $region24: #{tpu_custom_call.1} parent=11 // pred_fallthru
        _
      // Predicated region
      $region25: #{tpu_custom_call.1} parent=11 // pred_check
        %p198 = pneg %p148
      $region26: #{tpu_custom_call.1} parent=11 // pred_check_branch
        %200 = sbr.rel (%p198) target = $region28
      $region27: #{tpu_custom_call.1} parent=11 // pred_region
        _
      $region28: #{tpu_custom_call.1} parent=11 // pred_fallthru
        _
    $region12: #{tpu_custom_call.1} parent=5 // pred_fallthru
      _
    %p201 = scmp.lt.s32.totalorder %s12, 2
    // Predicated region
    $region29: #{tpu_custom_call.1} parent=5 // pred_check
      %p202 = pneg %p201
    $region30: #{tpu_custom_call.1} parent=5 // pred_check_branch
      %204 = sbr.rel (%p202) target = $region32
    $region31: #{tpu_custom_call.1} parent=5 // pred_region
      // Predicated region
      $region33: #{tpu_custom_call.1} parent=31 // pred_check
        %p205 = pneg %p32
      $region34: #{tpu_custom_call.1} parent=31 // pred_check_branch
        %207 = sbr.rel (%p205) target = $region36
      $region35: #{tpu_custom_call.1} parent=31 // pred_region
        %s208 = smul.u32 16, %s12
        %p209 = scmp.lt.s32.totalorder %s208, 31
        %s210 = scalar_select %p209, %s208, 31
        %s211 = smul.addr %s210, 8
        %s212 = scalar_lea.vmem %s0, %s211
        %s213 = smul.u32 16, %s12
      $region36: #{tpu_custom_call.1} parent=31 // pred_fallthru
        _
      // Predicated region
      $region37: #{tpu_custom_call.1} parent=31 // pred_check
        %p214 = pneg %p58
      $region38: #{tpu_custom_call.1} parent=31 // pred_check_branch
        %216 = sbr.rel (%p214) target = $region40
      $region39: #{tpu_custom_call.1} parent=31 // pred_region
        %s217 = smul.u32 16, %s12
        %p218 = scmp.lt.s32.totalorder %s217, 31
        %s219 = scalar_select %p218, %s217, 31
        %s220 = smul.addr %s219, 4
        %s221 = scalar_lea.vmem %s1, %s220
        %s222 = smul.u32 16, %s12
      $region40: #{tpu_custom_call.1} parent=31 // pred_fallthru
        _
    $region32: #{tpu_custom_call.1} parent=5 // pred_fallthru
      _
    %p223 = scmp.le.s32.totalorder 1, %s12
    %p224 = scmp.lt.s32.totalorder %s12, 3
    %p225 = pnand %p223, %p224
    %p226 = pneg %p225
    // Predicated region
    $region41: #{tpu_custom_call.1} parent=5 // pred_check
      _
    $region42: #{tpu_custom_call.1} parent=5 // pred_check_branch
      %228 = sbr.rel (%p225) target = $region44
    $region43: #{tpu_custom_call.1} parent=5 // pred_region
      %s229 = ssub.s32 %s12, 1
      %s230 = smul.u32 16, %s17
      %p231 = scmp.lt.s32.totalorder %s230, 31
      %s232 = scalar_select %p231, %s230, 31
      %s233 = smul.addr %s232, 8
      %s234 = scalar_lea.vmem %s0, %s233
      %p235 = pneg %p38
      %p236 = pneg %p35
      %s237 = smul.u32 16, %s17
      %p238 = scmp.lt.s32.totalorder %s237, 31
      %s239 = scalar_select %p238, %s237, 31
      %s240 = smul.addr %s239, 4
      %s241 = scalar_lea.vmem %s1, %s240
      %p242 = pneg %p64
      %p243 = pneg %p61
      %p244 = pneg %p85
      %p245 = pneg %p82
      %p246 = pneg %p106
      %p247 = pneg %p103
      %p248 = pneg %p127
      %p249 = pneg %p124
      %p250 = pneg %p148
      %p251 = pneg %p145
      %p252 = pneg %p174
      %p253 = pneg %p171
      %s254 = smul.u32 16, %s17
      %p255 = scmp.lt.s32.totalorder %s254, 31
      %s256 = scalar_select %p255, %s254, 31
      %s257 = smul.addr %s256, 8
      %s258 = scalar_lea.vmem %s6, %s257
      %s259 = smul.u32 16, %s17
      %p260 = scmp.lt.s32.totalorder %s259, 31
      %s261 = scalar_select %p260, %s259, 31
      %s262 = smul.addr %s261, 8
      %s263 = scalar_lea.vmem %s0, %s262
      %s264 = smul.u32 16, %s17
      %s265 = smul.u32 16, %s17
      %p266 = scmp.lt.s32.totalorder %s265, 31
      %s267 = scalar_select %p266, %s265, 31
      %s268 = smul.addr %s267, 4
      %s269 = scalar_lea.vmem %s1, %s268
      %s270 = smul.u32 16, %s17
      %s271 = smul.u32 16, %s17
      %p272 = scmp.lt.s32.totalorder %s271, 31
      %s273 = scalar_select %p272, %s271, 31
      %s274 = smul.addr %s273, 8
      %s275 = scalar_lea.vmem %s6, %s274
      %s276 = smul.u32 16, %s17
      %v278 = vld [vmem:[%s263] sm:$0xff]
      %v279 = vld [vmem:[%s263 + $0x8] sm:$0xff]
      %v280 = vld [vmem:[%s263 + $0x10] sm:$0xff]
      %v281 = vld [vmem:[%s263 + $0x18] sm:$0xff]
      %v282 = vld [vmem:[%s263 + $0x20] sm:$0xff]
      %v283 = vld [vmem:[%s263 + $0x28] sm:$0xff]
      %v284 = vld [vmem:[%s263 + $0x30] sm:$0xff]
      %v285 = vld [vmem:[%s263 + $0x38] sm:$0xff]
      %v286 = vld [vmem:[%s263 + $0x40] sm:$0xff]
      %v287 = vld [vmem:[%s263 + $0x48] sm:$0xff]
      %v288 = vld [vmem:[%s263 + $0x50] sm:$0xff]
      %v289 = vld [vmem:[%s263 + $0x58] sm:$0xff]
      %v290 = vld [vmem:[%s263 + $0x60] sm:$0xff]
      %v291 = vld [vmem:[%s263 + $0x68] sm:$0xff]
      %v292 = vld [vmem:[%s263 + $0x70] sm:$0xff]
      %v293 = vld [vmem:[%s263 + $0x78] sm:$0xff]
      %v294 = vld [vmem:[%s269] sm:$0xf]
      %v295 = vld [vmem:[%s269 + $0x4] sm:$0xf]
      %v296 = vld [vmem:[%s269 + $0x8] sm:$0xf]
      %v297 = vld [vmem:[%s269 + $0xc] sm:$0xf]
      %v298 = vld [vmem:[%s269 + $0x10] sm:$0xf]
      %v299 = vld [vmem:[%s269 + $0x14] sm:$0xf]
      %v300 = vld [vmem:[%s269 + $0x18] sm:$0xf]
      %v301 = vld [vmem:[%s269 + $0x1c] sm:$0xf]
      %v302 = vld [vmem:[%s269 + $0x20] sm:$0xf]
      %v303 = vld [vmem:[%s269 + $0x24] sm:$0xf]
      %v304 = vld [vmem:[%s269 + $0x28] sm:$0xf]
      %v305 = vld [vmem:[%s269 + $0x2c] sm:$0xf]
      %v306 = vld [vmem:[%s269 + $0x30] sm:$0xf]
      %v307 = vld [vmem:[%s269 + $0x34] sm:$0xf]
      %v308 = vld [vmem:[%s269 + $0x38] sm:$0xf]
      %v309 = vld [vmem:[%s269 + $0x3c] sm:$0xf]
      %v310 = vld [vmem:[%s2] sm:$0x1]
      %v311 = vld [vmem:[%s2 + $0x1] sm:$0x1]
      %v312 = vld [vmem:[%s2 + $0x2] sm:$0x1]
      %v313 = vld [vmem:[%s2 + $0x3] sm:$0x1]
      %v314 = vld [vmem:[%s2 + $0x4] sm:$0x1]
      %v316 = vlaneseq
      %v317 = vshrl.u32 %v316, 7
      %v318 = vsub.s32 0, %v317
      %v319 = vrot.slane %v310, %v318
      %v321 = vmul.f32 %v278, %v319
      %v322 = vmul.f32 %v279, %v319
      %v323 = vmul.f32 %v280, %v319
      %v324 = vmul.f32 %v281, %v319
      %v325 = vmul.f32 %v282, %v319
      %v326 = vmul.f32 %v283, %v319
      %v327 = vmul.f32 %v284, %v319
      %v328 = vmul.f32 %v285, %v319
      %v329 = vmul.f32 %v286, %v319
      %v330 = vmul.f32 %v287, %v319
      %v331 = vmul.f32 %v288, %v319
      %v332 = vmul.f32 %v289, %v319
      %v333 = vmul.f32 %v290, %v319
      %v334 = vmul.f32 %v291, %v319
      %v335 = vmul.f32 %v292, %v319
      %v336 = vmul.f32 %v293, %v319
      %vm337 = vcmask 130048
      %v338 = vsel %vm337, %v321, 0.0
      %339 = vadd.xlane.f32.xlu0 %v338
      %v340 = vpop.xlane.xlu0 %339
      %v341 = vsel %vm337, %v322, 0.0
      %342 = vadd.xlane.f32.xlu0 %v341
      %v343 = vpop.xlane.xlu0 %342
      %v344 = vsel %vm337, %v323, 0.0
      %345 = vadd.xlane.f32.xlu0 %v344
      %v346 = vpop.xlane.xlu0 %345
      %v347 = vsel %vm337, %v324, 0.0
      %348 = vadd.xlane.f32.xlu0 %v347
      %v349 = vpop.xlane.xlu0 %348
      %v350 = vsel %vm337, %v325, 0.0
      %351 = vadd.xlane.f32.xlu0 %v350
      %v352 = vpop.xlane.xlu0 %351
      %v353 = vsel %vm337, %v326, 0.0
      %354 = vadd.xlane.f32.xlu0 %v353
      %v355 = vpop.xlane.xlu0 %354
      %v356 = vsel %vm337, %v327, 0.0
      %357 = vadd.xlane.f32.xlu0 %v356
      %v358 = vpop.xlane.xlu0 %357
      %v359 = vsel %vm337, %v328, 0.0
      %360 = vadd.xlane.f32.xlu0 %v359
      %v361 = vpop.xlane.xlu0 %360
      %v362 = vsel %vm337, %v329, 0.0
      %363 = vadd.xlane.f32.xlu0 %v362
      %v364 = vpop.xlane.xlu0 %363
      %v365 = vsel %vm337, %v330, 0.0
      %366 = vadd.xlane.f32.xlu0 %v365
      %v367 = vpop.xlane.xlu0 %366
      %v368 = vsel %vm337, %v331, 0.0
      %369 = vadd.xlane.f32.xlu0 %v368
      %v370 = vpop.xlane.xlu0 %369
      %v371 = vsel %vm337, %v332, 0.0
      %372 = vadd.xlane.f32.xlu0 %v371
      %v373 = vpop.xlane.xlu0 %372
      %v374 = vsel %vm337, %v333, 0.0
      %375 = vadd.xlane.f32.xlu0 %v374
      %v376 = vpop.xlane.xlu0 %375
      %v377 = vsel %vm337, %v334, 0.0
      %378 = vadd.xlane.f32.xlu0 %v377
      %v379 = vpop.xlane.xlu0 %378
      %v380 = vsel %vm337, %v335, 0.0
      %381 = vadd.xlane.f32.xlu0 %v380
      %v382 = vpop.xlane.xlu0 %381
      %v383 = vsel %vm337, %v336, 0.0
      %384 = vadd.xlane.f32.xlu0 %v383
      %v385 = vpop.xlane.xlu0 %384
      %v387 = vlaneseq
      %v388 = vshrl.u32 %v387, 7
      %v389 = vsub.s32 0, %v388
      %v390 = vrot.slane %v314, %v389
      %v392 = vadd.f32 %v340, %v390
      %v393 = vadd.f32 %v343, %v390
      %v394 = vadd.f32 %v346, %v390
      %v395 = vadd.f32 %v349, %v390
      %v396 = vadd.f32 %v352, %v390
      %v397 = vadd.f32 %v355, %v390
      %v398 = vadd.f32 %v358, %v390
      %v399 = vadd.f32 %v361, %v390
      %v400 = vadd.f32 %v364, %v390
      %v401 = vadd.f32 %v367, %v390
      %v402 = vadd.f32 %v370, %v390
      %v403 = vadd.f32 %v373, %v390
      %v404 = vadd.f32 %v376, %v390
      %v405 = vadd.f32 %v379, %v390
      %v406 = vadd.f32 %v382, %v390
      %v407 = vadd.f32 %v385, %v390
      %v408 = vunpack.c.l.bf16 %v294
      %v409 = vunpack.c.l.bf16 %v295
      %v410 = vunpack.c.l.bf16 %v296
      %v411 = vunpack.c.l.bf16 %v297
      %v412 = vunpack.c.l.bf16 %v298
      %v413 = vunpack.c.l.bf16 %v299
      %v414 = vunpack.c.l.bf16 %v300
      %v415 = vunpack.c.l.bf16 %v301
      %v416 = vunpack.c.l.bf16 %v302
      %v417 = vunpack.c.l.bf16 %v303
      %v418 = vunpack.c.l.bf16 %v304
      %v419 = vunpack.c.l.bf16 %v305
      %v420 = vunpack.c.l.bf16 %v306
      %v421 = vunpack.c.l.bf16 %v307
      %v422 = vunpack.c.l.bf16 %v308
      %v423 = vunpack.c.l.bf16 %v309
      %424 = vadd.xlane.f32.xlu0 %v408
      %v425 = vpop.xlane.xlu0 %424
      %426 = vadd.xlane.f32.xlu0 %v409
      %v427 = vpop.xlane.xlu0 %426
      %428 = vadd.xlane.f32.xlu0 %v410
      %v429 = vpop.xlane.xlu0 %428
      %430 = vadd.xlane.f32.xlu0 %v411
      %v431 = vpop.xlane.xlu0 %430
      %432 = vadd.xlane.f32.xlu0 %v412
      %v433 = vpop.xlane.xlu0 %432
      %434 = vadd.xlane.f32.xlu0 %v413
      %v435 = vpop.xlane.xlu0 %434
      %436 = vadd.xlane.f32.xlu0 %v414
      %v437 = vpop.xlane.xlu0 %436
      %438 = vadd.xlane.f32.xlu0 %v415
      %v439 = vpop.xlane.xlu0 %438
      %440 = vadd.xlane.f32.xlu0 %v416
      %v441 = vpop.xlane.xlu0 %440
      %442 = vadd.xlane.f32.xlu0 %v417
      %v443 = vpop.xlane.xlu0 %442
      %444 = vadd.xlane.f32.xlu0 %v418
      %v445 = vpop.xlane.xlu0 %444
      %446 = vadd.xlane.f32.xlu0 %v419
      %v447 = vpop.xlane.xlu0 %446
      %448 = vadd.xlane.f32.xlu0 %v420
      %v449 = vpop.xlane.xlu0 %448
      %450 = vadd.xlane.f32.xlu0 %v421
      %v451 = vpop.xlane.xlu0 %450
      %452 = vadd.xlane.f32.xlu0 %v422
      %v453 = vpop.xlane.xlu0 %452
      %454 = vadd.xlane.f32.xlu0 %v423
      %v455 = vpop.xlane.xlu0 %454
      %v456 = vmul.f32 %v408, %v408
      %v457 = vmul.f32 %v409, %v409
      %v458 = vmul.f32 %v410, %v410
      %v459 = vmul.f32 %v411, %v411
      %v460 = vmul.f32 %v412, %v412
      %v461 = vmul.f32 %v413, %v413
      %v462 = vmul.f32 %v414, %v414
      %v463 = vmul.f32 %v415, %v415
      %v464 = vmul.f32 %v416, %v416
      %v465 = vmul.f32 %v417, %v417
      %v466 = vmul.f32 %v418, %v418
      %v467 = vmul.f32 %v419, %v419
      %v468 = vmul.f32 %v420, %v420
      %v469 = vmul.f32 %v421, %v421
      %v470 = vmul.f32 %v422, %v422
      %v471 = vmul.f32 %v423, %v423
      %472 = vadd.xlane.f32.xlu0 %v456
      %v473 = vpop.xlane.xlu0 %472
      %474 = vadd.xlane.f32.xlu0 %v457
      %v475 = vpop.xlane.xlu0 %474
      %476 = vadd.xlane.f32.xlu0 %v458
      %v477 = vpop.xlane.xlu0 %476
      %478 = vadd.xlane.f32.xlu0 %v459
      %v479 = vpop.xlane.xlu0 %478
      %480 = vadd.xlane.f32.xlu0 %v460
      %v481 = vpop.xlane.xlu0 %480
      %482 = vadd.xlane.f32.xlu0 %v461
      %v483 = vpop.xlane.xlu0 %482
      %484 = vadd.xlane.f32.xlu0 %v462
      %v485 = vpop.xlane.xlu0 %484
      %486 = vadd.xlane.f32.xlu0 %v463
      %v487 = vpop.xlane.xlu0 %486
      %488 = vadd.xlane.f32.xlu0 %v464
      %v489 = vpop.xlane.xlu0 %488
      %490 = vadd.xlane.f32.xlu0 %v465
      %v491 = vpop.xlane.xlu0 %490
      %492 = vadd.xlane.f32.xlu0 %v466
      %v493 = vpop.xlane.xlu0 %492
      %494 = vadd.xlane.f32.xlu0 %v467
      %v495 = vpop.xlane.xlu0 %494
      %496 = vadd.xlane.f32.xlu0 %v468
      %v497 = vpop.xlane.xlu0 %496
      %498 = vadd.xlane.f32.xlu0 %v469
      %v499 = vpop.xlane.xlu0 %498
      %500 = vadd.xlane.f32.xlu0 %v470
      %v501 = vpop.xlane.xlu0 %500
      %502 = vadd.xlane.f32.xlu0 %v471
      %v503 = vpop.xlane.xlu0 %502
      %v504 = vmul.f32 %v425, %v425
      %v505 = vmul.f32 %v427, %v427
      %v506 = vmul.f32 %v429, %v429
      %v507 = vmul.f32 %v431, %v431
      %v508 = vmul.f32 %v433, %v433
      %v509 = vmul.f32 %v435, %v435
      %v510 = vmul.f32 %v437, %v437
      %v511 = vmul.f32 %v439, %v439
      %v512 = vmul.f32 %v441, %v441
      %v513 = vmul.f32 %v443, %v443
      %v514 = vmul.f32 %v445, %v445
      %v515 = vmul.f32 %v447, %v447
      %v516 = vmul.f32 %v449, %v449
      %v517 = vmul.f32 %v451, %v451
      %v518 = vmul.f32 %v453, %v453
      %v519 = vmul.f32 %v455, %v455
      %v520 = vsub.f32 %v504, %v473
      %v521 = vsub.f32 %v505, %v475
      %v522 = vsub.f32 %v506, %v477
      %v523 = vsub.f32 %v507, %v479
      %v524 = vsub.f32 %v508, %v481
      %v525 = vsub.f32 %v509, %v483
      %v526 = vsub.f32 %v510, %v485
      %v527 = vsub.f32 %v511, %v487
      %v528 = vsub.f32 %v512, %v489
      %v529 = vsub.f32 %v513, %v491
      %v530 = vsub.f32 %v514, %v493
      %v531 = vsub.f32 %v515, %v495
      %v532 = vsub.f32 %v516, %v497
      %v533 = vsub.f32 %v517, %v499
      %v534 = vsub.f32 %v518, %v501
      %v535 = vsub.f32 %v519, %v503
      %v536 = vmul.f32 %v520, 0.5
      %v537 = vmul.f32 %v521, 0.5
      %v538 = vmul.f32 %v522, 0.5
      %v539 = vmul.f32 %v523, 0.5
      %v540 = vmul.f32 %v524, 0.5
      %v541 = vmul.f32 %v525, 0.5
      %v542 = vmul.f32 %v526, 0.5
      %v543 = vmul.f32 %v527, 0.5
      %v544 = vmul.f32 %v528, 0.5
      %v545 = vmul.f32 %v529, 0.5
      %v546 = vmul.f32 %v530, 0.5
      %v547 = vmul.f32 %v531, 0.5
      %v548 = vmul.f32 %v532, 0.5
      %v549 = vmul.f32 %v533, 0.5
      %v550 = vmul.f32 %v534, 0.5
      %v551 = vmul.f32 %v535, 0.5
      %v552 = vpack.c.bf16 %v279, %v278
      %v553 = vpack.c.bf16 %v281, %v280
      %v554 = vpack.c.bf16 %v283, %v282
      %v555 = vpack.c.bf16 %v285, %v284
      %v556 = vpack.c.bf16 %v287, %v286
      %v557 = vpack.c.bf16 %v289, %v288
      %v558 = vpack.c.bf16 %v291, %v290
      %v559 = vpack.c.bf16 %v293, %v292
      %v560 = vld [vmem:[%s3] sm:$0xf]
      %v561 = vld [vmem:[%s3 + $0x4] sm:$0xf]
      %v562 = vld [vmem:[%s4] sm:$0xf]
      %v563 = vld [vmem:[%s4 + $0x4] sm:$0xf]
      %v564 = vld [vmem:[%s4 + $0x8] sm:$0xf]
      %v565 = vld [vmem:[%s4 + $0xc] sm:$0xf]
      %v566 = vld [vmem:[%s4 + $0x10] sm:$0xf]
      %v567 = vld [vmem:[%s4 + $0x14] sm:$0xf]
      %v568 = vld [vmem:[%s4 + $0x18] sm:$0xf]
      %v569 = vld [vmem:[%s4 + $0x1c] sm:$0xf]
      %v570 = vld [vmem:[%s4 + $0x20] sm:$0xf]
      %v571 = vld [vmem:[%s4 + $0x24] sm:$0xf]
      %v572 = vld [vmem:[%s4 + $0x28] sm:$0xf]
      %v573 = vld [vmem:[%s4 + $0x2c] sm:$0xf]
      %v574 = vld [vmem:[%s4 + $0x30] sm:$0xf]
      %v575 = vld [vmem:[%s4 + $0x34] sm:$0xf]
      %v576 = vld [vmem:[%s4 + $0x38] sm:$0xf]
      %v577 = vld [vmem:[%s4 + $0x3c] sm:$0xf]
      %v594 = vunpack.c.l.b16 %v294
      %v595 = vunpack.c.l.b16 %v295
      %v596 = vunpack.c.l.b16 %v296
      %v597 = vunpack.c.l.b16 %v297
      %v598 = vunpack.c.l.b16 %v298
      %v599 = vunpack.c.l.b16 %v299
      %v600 = vunpack.c.l.b16 %v300
      %v601 = vunpack.c.l.b16 %v301
      %v602 = vunpack.c.l.b16 %v302
      %v603 = vunpack.c.l.b16 %v303
      %v604 = vunpack.c.l.b16 %v304
      %v605 = vunpack.c.l.b16 %v305
      %v606 = vunpack.c.l.b16 %v306
      %v607 = vunpack.c.l.b16 %v307
      %v608 = vunpack.c.l.b16 %v308
      %v609 = vunpack.c.l.b16 %v309
      %v610 = vpack.c.b16 %v595, %v594
      %v611 = vpack.c.b16 %v597, %v596
      %v612 = vpack.c.b16 %v599, %v598
      %v613 = vpack.c.b16 %v601, %v600
      %v614 = vpack.c.b16 %v603, %v602
      %v615 = vpack.c.b16 %v605, %v604
      %v616 = vpack.c.b16 %v607, %v606
      %v617 = vpack.c.b16 %v609, %v608
      %v642 = vunpack.c.l.b16 %v562
      %v643 = vunpack.c.l.b16 %v563
      %v644 = vunpack.c.l.b16 %v564
      %v645 = vunpack.c.l.b16 %v565
      %v646 = vunpack.c.l.b16 %v566
      %v647 = vunpack.c.l.b16 %v567
      %v648 = vunpack.c.l.b16 %v568
      %v649 = vunpack.c.l.b16 %v569
      %v650 = vunpack.c.l.b16 %v570
      %v651 = vunpack.c.l.b16 %v571
      %v652 = vunpack.c.l.b16 %v572
      %v653 = vunpack.c.l.b16 %v573
      %v654 = vunpack.c.l.b16 %v574
      %v655 = vunpack.c.l.b16 %v575
      %v656 = vunpack.c.l.b16 %v576
      %v657 = vunpack.c.l.b16 %v577
      %v658 = vpack.c.b16 %v643, %v642
      %v659 = vpack.c.b16 %v645, %v644
      %v660 = vpack.c.b16 %v647, %v646
      %v661 = vpack.c.b16 %v649, %v648
      %v662 = vpack.c.b16 %v651, %v650
      %v663 = vpack.c.b16 %v653, %v652
      %v664 = vpack.c.b16 %v655, %v654
      %v665 = vpack.c.b16 %v657, %v656
      %674 = vmatprep.subr.bf16.mxu0 0
      %675 = vmatpush1.bf16.msra.mxu0 %v658
      %676 = vmatprep.subr.bf16.mxu0 0
      %677 = vmatpush1.bf16.msra.mxu0 %v659
      %678 = vmatprep.subr.bf16.mxu0 0
      %679 = vmatpush1.bf16.msra.mxu0 %v660
      %680 = vmatprep.subr.bf16.mxu0 0
      %681 = vmatpush1.bf16.msra.mxu0 %v661
      %682 = vmatprep.subr.bf16.mxu0 0
      %683 = vmatpush1.bf16.msra.mxu0 %v662
      %684 = vmatprep.subr.bf16.mxu0 0
      %685 = vmatpush1.bf16.msra.mxu0 %v663
      %686 = vmatprep.subr.bf16.mxu0 0
      %687 = vmatpush1.bf16.msra.mxu0 %v664
      %688 = vmatprep.subr.bf16.mxu0 0
      %689 = vmatpush1.bf16.msra.mxu0 %v665
      %690 = vmatprep.subr.bf16.mxu0 0
      %691 = vmatpush1.bf16.msra.mxu0 0
      %692 = vmatprep.subr.bf16.mxu0 0
      %693 = vmatpush1.bf16.msra.mxu0 0
      %694 = vmatprep.subr.bf16.mxu0 0
      %695 = vmatpush1.bf16.msra.mxu0 0
      %696 = vmatprep.subr.bf16.mxu0 0
      %697 = vmatpush1.bf16.msra.mxu0 0
      %698 = vmatprep.subr.bf16.mxu0 0
      %699 = vmatpush1.bf16.msra.mxu0 0
      %700 = vmatprep.subr.bf16.mxu0 0
      %701 = vmatpush1.bf16.msra.mxu0 0
      %702 = vmatprep.subr.bf16.mxu0 0
      %703 = vmatpush1.bf16.msra.mxu0 0
      %704 = vmatprep.subr.bf16.mxu0 0
      %705 = vmatpush1.bf16.msra.mxu0 0
      %706 = vmatprep.mubr.bf16.mxu0 0
      %707 = vmatmul.mubr.bf16.gmra.mrb[0].mxu0 %v610
      %v708 = vpop.f32.mrb[0].mxu0
      %v709 = vadd.f32 0.0, %v708
      %v710 = vpop.f32.mrb[0].mxu0
      %v711 = vpop.f32.mrb[0].mxu0
      %v712 = vadd.f32 0.0, %v711
      %v713 = vpop.f32.mrb[0].mxu0
      %714 = vmatprep.mubr.bf16.mxu0 0
      %715 = vmatmul.mubr.bf16.gmra.mrb[0].mxu0 %v611
      %v716 = vpop.f32.mrb[0].mxu0
      %v717 = vadd.f32 0.0, %v716
      %v718 = vpop.f32.mrb[0].mxu0
      %v719 = vpop.f32.mrb[0].mxu0
      %v720 = vadd.f32 0.0, %v719
      %v721 = vpop.f32.mrb[0].mxu0
      %722 = vmatprep.mubr.bf16.mxu0 0
      %723 = vmatmul.mubr.bf16.gmra.mrb[0].mxu0 %v612
      %v724 = vpop.f32.mrb[0].mxu0
      %v725 = vadd.f32 0.0, %v724
      %v726 = vpop.f32.mrb[0].mxu0
      %v727 = vpop.f32.mrb[0].mxu0
      %v728 = vadd.f32 0.0, %v727
      %v729 = vpop.f32.mrb[0].mxu0
      %730 = vmatprep.mubr.bf16.mxu0 0
      %731 = vmatmul.mubr.bf16.gmra.mrb[0].mxu0 %v613
      %v732 = vpop.f32.mrb[0].mxu0
      %v733 = vadd.f32 0.0, %v732
      %v734 = vpop.f32.mrb[0].mxu0
      %v735 = vpop.f32.mrb[0].mxu0
      %v736 = vadd.f32 0.0, %v735
      %v737 = vpop.f32.mrb[0].mxu0
      %738 = vmatprep.mubr.bf16.mxu0 0
      %739 = vmatmul.mubr.bf16.gmra.mrb[0].mxu0 %v614
      %v740 = vpop.f32.mrb[0].mxu0
      %v741 = vadd.f32 0.0, %v740
      %v742 = vpop.f32.mrb[0].mxu0
      %v743 = vpop.f32.mrb[0].mxu0
      %v744 = vadd.f32 0.0, %v743
      %v745 = vpop.f32.mrb[0].mxu0
      %746 = vmatprep.mubr.bf16.mxu0 0
      %747 = vmatmul.mubr.bf16.gmra.mrb[0].mxu0 %v615
      %v748 = vpop.f32.mrb[0].mxu0
      %v749 = vadd.f32 0.0, %v748
      %v750 = vpop.f32.mrb[0].mxu0
      %v751 = vpop.f32.mrb[0].mxu0
      %v752 = vadd.f32 0.0, %v751
      %v753 = vpop.f32.mrb[0].mxu0
      %754 = vmatprep.mubr.bf16.mxu0 0
      %755 = vmatmul.mubr.bf16.gmra.mrb[0].mxu0 %v616
      %v756 = vpop.f32.mrb[0].mxu0
      %v757 = vadd.f32 0.0, %v756
      %v758 = vpop.f32.mrb[0].mxu0
      %v759 = vpop.f32.mrb[0].mxu0
      %v760 = vadd.f32 0.0, %v759
      %v761 = vpop.f32.mrb[0].mxu0
      %762 = vmatprep.mubr.bf16.mxu0 0
      %763 = vmatmul.mubr.bf16.gmra.mrb[0].mxu0 %v617
      %v764 = vpop.f32.mrb[0].mxu0
      %v765 = vadd.f32 0.0, %v764
      %v766 = vpop.f32.mrb[0].mxu0
      %v767 = vpop.f32.mrb[0].mxu0
      %v768 = vadd.f32 0.0, %v767
      %v769 = vpop.f32.mrb[0].mxu0
      %770 = vdwg.mxu0
      %v773 = vunpack.c.l.b16 %v560
      %v774 = vunpack.c.l.b16 %v561
      %v775 = vpack.c.b16 %v774, %v773
      %v778 = vsel %vm337, %v552, 0
      %v781 = vsel %vm337, %v553, 0
      %v784 = vsel %vm337, %v554, 0
      %v787 = vsel %vm337, %v555, 0
      %v790 = vsel %vm337, %v556, 0
      %v793 = vsel %vm337, %v557, 0
      %v796 = vsel %vm337, %v558, 0
      %v799 = vsel %vm337, %v559, 0
      %801 = vmatprep.subr.bf16.mxu0 0
      %802 = vmatpush1.bf16.msra.mxu0 %v775
      %803 = vmatprep.subr.bf16.mxu0 0
      %804 = vmatpush1.bf16.msra.mxu0 0
      %805 = vmatprep.subr.bf16.mxu0 0
      %806 = vmatpush1.bf16.msra.mxu0 0
      %807 = vmatprep.subr.bf16.mxu0 0
      %808 = vmatpush1.bf16.msra.mxu0 0
      %809 = vmatprep.subr.bf16.mxu0 0
      %810 = vmatpush1.bf16.msra.mxu0 0
      %811 = vmatprep.subr.bf16.mxu0 0
      %812 = vmatpush1.bf16.msra.mxu0 0
      %813 = vmatprep.subr.bf16.mxu0 0
      %814 = vmatpush1.bf16.msra.mxu0 0
      %815 = vmatprep.subr.bf16.mxu0 0
      %816 = vmatpush1.bf16.msra.mxu0 0
      %817 = vmatprep.subr.bf16.mxu0 0
      %818 = vmatpush1.bf16.msra.mxu0 0
      %819 = vmatprep.subr.bf16.mxu0 0
      %820 = vmatpush1.bf16.msra.mxu0 0
      %821 = vmatprep.subr.bf16.mxu0 0
      %822 = vmatpush1.bf16.msra.mxu0 0
      %823 = vmatprep.subr.bf16.mxu0 0
      %824 = vmatpush1.bf16.msra.mxu0 0
      %825 = vmatprep.subr.bf16.mxu0 0
      %826 = vmatpush1.bf16.msra.mxu0 0
      %827 = vmatprep.subr.bf16.mxu0 0
      %828 = vmatpush1.bf16.msra.mxu0 0
      %829 = vmatprep.subr.bf16.mxu0 0
      %830 = vmatpush1.bf16.msra.mxu0 0
      %831 = vmatprep.subr.bf16.mxu0 0
      %832 = vmatpush1.bf16.msra.mxu0 0
      %833 = vmatprep.mubr.bf16.mxu0 0
      %834 = vmatmul.mubr.bf16.gmra.mrb[0].mxu0 %v778
      %v835 = vpop.f32.mrb[0].mxu0
      %v836 = vadd.f32 %v709, %v835
      %v837 = vpop.f32.mrb[0].mxu0
      %v838 = vpop.f32.mrb[0].mxu0
      %v839 = vadd.f32 %v712, %v838
      %v840 = vpop.f32.mrb[0].mxu0
      %841 = vmatprep.mubr.bf16.mxu0 0
      %842 = vmatmul.mubr.bf16.gmra.mrb[0].mxu0 %v781
      %v843 = vpop.f32.mrb[0].mxu0
      %v844 = vadd.f32 %v717, %v843
      %v845 = vpop.f32.mrb[0].mxu0
      %v846 = vpop.f32.mrb[0].mxu0
      %v847 = vadd.f32 %v720, %v846
      %v848 = vpop.f32.mrb[0].mxu0
      %849 = vmatprep.mubr.bf16.mxu0 0
      %850 = vmatmul.mubr.bf16.gmra.mrb[0].mxu0 %v784
      %v851 = vpop.f32.mrb[0].mxu0
      %v852 = vadd.f32 %v725, %v851
      %v853 = vpop.f32.mrb[0].mxu0
      %v854 = vpop.f32.mrb[0].mxu0
      %v855 = vadd.f32 %v728, %v854
      %v856 = vpop.f32.mrb[0].mxu0
      %857 = vmatprep.mubr.bf16.mxu0 0
      %858 = vmatmul.mubr.bf16.gmra.mrb[0].mxu0 %v787
      %v859 = vpop.f32.mrb[0].mxu0
      %v860 = vadd.f32 %v733, %v859
      %v861 = vpop.f32.mrb[0].mxu0
      %v862 = vpop.f32.mrb[0].mxu0
      %v863 = vadd.f32 %v736, %v862
      %v864 = vpop.f32.mrb[0].mxu0
      %865 = vmatprep.mubr.bf16.mxu0 0
      %866 = vmatmul.mubr.bf16.gmra.mrb[0].mxu0 %v790
      %v867 = vpop.f32.mrb[0].mxu0
      %v868 = vadd.f32 %v741, %v867
      %v869 = vpop.f32.mrb[0].mxu0
      %v870 = vpop.f32.mrb[0].mxu0
      %v871 = vadd.f32 %v744, %v870
      %v872 = vpop.f32.mrb[0].mxu0
      %873 = vmatprep.mubr.bf16.mxu0 0
      %874 = vmatmul.mubr.bf16.gmra.mrb[0].mxu0 %v793
      %v875 = vpop.f32.mrb[0].mxu0
      %v876 = vadd.f32 %v749, %v875
      %v877 = vpop.f32.mrb[0].mxu0
      %v878 = vpop.f32.mrb[0].mxu0
      %v879 = vadd.f32 %v752, %v878
      %v880 = vpop.f32.mrb[0].mxu0
      %881 = vmatprep.mubr.bf16.mxu0 0
      %882 = vmatmul.mubr.bf16.gmra.mrb[0].mxu0 %v796
      %v883 = vpop.f32.mrb[0].mxu0
      %v884 = vadd.f32 %v757, %v883
      %v885 = vpop.f32.mrb[0].mxu0
      %v886 = vpop.f32.mrb[0].mxu0
      %v887 = vadd.f32 %v760, %v886
      %v888 = vpop.f32.mrb[0].mxu0
      %889 = vmatprep.mubr.bf16.mxu0 0
      %890 = vmatmul.mubr.bf16.gmra.mrb[0].mxu0 %v799
      %v891 = vpop.f32.mrb[0].mxu0
      %v892 = vadd.f32 %v765, %v891
      %v893 = vpop.f32.mrb[0].mxu0
      %v894 = vpop.f32.mrb[0].mxu0
      %v895 = vadd.f32 %v768, %v894
      %v896 = vpop.f32.mrb[0].mxu0
      %897 = vdwg.mxu0
      %v899 = vlaneseq
      %v900 = vshrl.u32 %v899, 7
      %v901 = vsub.s32 0, %v900
      %v902 = vrot.slane %v311, %v901
      %v904 = vadd.f32 %v836, %v902
      %v905 = vadd.f32 %v839, %v902
      %v906 = vadd.f32 %v844, %v902
      %v907 = vadd.f32 %v847, %v902
      %v908 = vadd.f32 %v852, %v902
      %v909 = vadd.f32 %v855, %v902
      %v910 = vadd.f32 %v860, %v902
      %v911 = vadd.f32 %v863, %v902
      %v912 = vadd.f32 %v868, %v902
      %v913 = vadd.f32 %v871, %v902
      %v914 = vadd.f32 %v876, %v902
      %v915 = vadd.f32 %v879, %v902
      %v916 = vadd.f32 %v884, %v902
      %v917 = vadd.f32 %v887, %v902
      %v918 = vadd.f32 %v892, %v902
      %v919 = vadd.f32 %v895, %v902
      %v920 = vmax.f32 %v904, 0.0
      %v921 = vmax.f32 %v905, 0.0
      %v922 = vmax.f32 %v906, 0.0
      %v923 = vmax.f32 %v907, 0.0
      %v924 = vmax.f32 %v908, 0.0
      %v925 = vmax.f32 %v909, 0.0
      %v926 = vmax.f32 %v910, 0.0
      %v927 = vmax.f32 %v911, 0.0
      %v928 = vmax.f32 %v912, 0.0
      %v929 = vmax.f32 %v913, 0.0
      %v930 = vmax.f32 %v914, 0.0
      %v931 = vmax.f32 %v915, 0.0
      %v932 = vmax.f32 %v916, 0.0
      %v933 = vmax.f32 %v917, 0.0
      %v934 = vmax.f32 %v918, 0.0
      %v935 = vmax.f32 %v919, 0.0
      %v936 = vpack.c.bf16 %v921, %v920
      %v937 = vpack.c.bf16 %v923, %v922
      %v938 = vpack.c.bf16 %v925, %v924
      %v939 = vpack.c.bf16 %v927, %v926
      %v940 = vpack.c.bf16 %v929, %v928
      %v941 = vpack.c.bf16 %v931, %v930
      %v942 = vpack.c.bf16 %v933, %v932
      %v943 = vpack.c.bf16 %v935, %v934
      %v944 = vld [vmem:[%s5] sm:$0xf]
      %v945 = vld [vmem:[%s5 + $0x4] sm:$0xf]
      %v946 = vld [vmem:[%s5 + $0x8] sm:$0xf]
      %v947 = vld [vmem:[%s5 + $0xc] sm:$0xf]
      %v948 = vld [vmem:[%s5 + $0x10] sm:$0xf]
      %v949 = vld [vmem:[%s5 + $0x14] sm:$0xf]
      %v950 = vld [vmem:[%s5 + $0x18] sm:$0xf]
      %v951 = vld [vmem:[%s5 + $0x1c] sm:$0xf]
      %v952 = vld [vmem:[%s5 + $0x20] sm:$0xf]
      %v953 = vld [vmem:[%s5 + $0x24] sm:$0xf]
      %v954 = vld [vmem:[%s5 + $0x28] sm:$0xf]
      %v955 = vld [vmem:[%s5 + $0x2c] sm:$0xf]
      %v956 = vld [vmem:[%s5 + $0x30] sm:$0xf]
      %v957 = vld [vmem:[%s5 + $0x34] sm:$0xf]
      %v958 = vld [vmem:[%s5 + $0x38] sm:$0xf]
      %v959 = vld [vmem:[%s5 + $0x3c] sm:$0xf]
      %v961 = vlaneseq
      %v962 = vshrl.u32 %v961, 7
      %v963 = vsub.s32 0, %v962
      %v964 = vrot.slane %v312, %v963
      %v982 = vunpack.c.l.b16 %v944
      %v983 = vunpack.c.l.b16 %v945
      %v984 = vunpack.c.l.b16 %v946
      %v985 = vunpack.c.l.b16 %v947
      %v986 = vunpack.c.l.b16 %v948
      %v987 = vunpack.c.l.b16 %v949
      %v988 = vunpack.c.l.b16 %v950
      %v989 = vunpack.c.l.b16 %v951
      %v990 = vunpack.c.l.b16 %v952
      %v991 = vunpack.c.l.b16 %v953
      %v992 = vunpack.c.l.b16 %v954
      %v993 = vunpack.c.l.b16 %v955
      %v994 = vunpack.c.l.b16 %v956
      %v995 = vunpack.c.l.b16 %v957
      %v996 = vunpack.c.l.b16 %v958
      %v997 = vunpack.c.l.b16 %v959
      %v998 = vpack.c.b16 %v983, %v982
      %v999 = vpack.c.b16 %v985, %v984
      %v1000 = vpack.c.b16 %v987, %v986
      %v1001 = vpack.c.b16 %v989, %v988
      %v1002 = vpack.c.b16 %v991, %v990
      %v1003 = vpack.c.b16 %v993, %v992
      %v1004 = vpack.c.b16 %v995, %v994
      %v1005 = vpack.c.b16 %v997, %v996
      %1014 = vmatprep.subr.bf16.mxu0 0
      %1015 = vmatpush1.bf16.msra.mxu0 %v998
      %1016 = vmatprep.subr.bf16.mxu0 0
      %1017 = vmatpush1.bf16.msra.mxu0 %v999
      %1018 = vmatprep.subr.bf16.mxu0 0
      %1019 = vmatpush1.bf16.msra.mxu0 %v1000
      %1020 = vmatprep.subr.bf16.mxu0 0
      %1021 = vmatpush1.bf16.msra.mxu0 %v1001
      %1022 = vmatprep.subr.bf16.mxu0 0
      %1023 = vmatpush1.bf16.msra.mxu0 %v1002
      %1024 = vmatprep.subr.bf16.mxu0 0
      %1025 = vmatpush1.bf16.msra.mxu0 %v1003
      %1026 = vmatprep.subr.bf16.mxu0 0
      %1027 = vmatpush1.bf16.msra.mxu0 %v1004
      %1028 = vmatprep.subr.bf16.mxu0 0
      %1029 = vmatpush1.bf16.msra.mxu0 %v1005
      %1030 = vmatprep.subr.bf16.mxu0 0
      %1031 = vmatpush1.bf16.msra.mxu0 0
      %1032 = vmatprep.subr.bf16.mxu0 0
      %1033 = vmatpush1.bf16.msra.mxu0 0
      %1034 = vmatprep.subr.bf16.mxu0 0
      %1035 = vmatpush1.bf16.msra.mxu0 0
      %1036 = vmatprep.subr.bf16.mxu0 0
      %1037 = vmatpush1.bf16.msra.mxu0 0
      %1038 = vmatprep.subr.bf16.mxu0 0
      %1039 = vmatpush1.bf16.msra.mxu0 0
      %1040 = vmatprep.subr.bf16.mxu0 0
      %1041 = vmatpush1.bf16.msra.mxu0 0
      %1042 = vmatprep.subr.bf16.mxu0 0
      %1043 = vmatpush1.bf16.msra.mxu0 0
      %1044 = vmatprep.subr.bf16.mxu0 0
      %1045 = vmatpush1.bf16.msra.mxu0 0
      %1046 = vmatprep.mubr.bf16.mxu0 0
      %1047 = vmatmul.mubr.bf16.gmra.mrb[0].mxu0 %v936
      %v1048 = vpop.f32.mrb[0].mxu0
      %v1049 = vadd.f32 %v964, %v1048
      %v1050 = vpop.f32.mrb[0].mxu0
      %v1051 = vpop.f32.mrb[0].mxu0
      %v1052 = vadd.f32 %v964, %v1051
      %v1053 = vpop.f32.mrb[0].mxu0
      %1054 = vmatprep.mubr.bf16.mxu0 0
      %1055 = vmatmul.mubr.bf16.gmra.mrb[0].mxu0 %v937
      %v1056 = vpop.f32.mrb[0].mxu0
      %v1057 = vadd.f32 %v964, %v1056
      %v1058 = vpop.f32.mrb[0].mxu0
      %v1059 = vpop.f32.mrb[0].mxu0
      %v1060 = vadd.f32 %v964, %v1059
      %v1061 = vpop.f32.mrb[0].mxu0
      %1062 = vmatprep.mubr.bf16.mxu0 0
      %1063 = vmatmul.mubr.bf16.gmra.mrb[0].mxu0 %v938
      %v1064 = vpop.f32.mrb[0].mxu0
      %v1065 = vadd.f32 %v964, %v1064
      %v1066 = vpop.f32.mrb[0].mxu0
      %v1067 = vpop.f32.mrb[0].mxu0
      %v1068 = vadd.f32 %v964, %v1067
      %v1069 = vpop.f32.mrb[0].mxu0
      %1070 = vmatprep.mubr.bf16.mxu0 0
      %1071 = vmatmul.mubr.bf16.gmra.mrb[0].mxu0 %v939
      %v1072 = vpop.f32.mrb[0].mxu0
      %v1073 = vadd.f32 %v964, %v1072
      %v1074 = vpop.f32.mrb[0].mxu0
      %v1075 = vpop.f32.mrb[0].mxu0
      %v1076 = vadd.f32 %v964, %v1075
      %v1077 = vpop.f32.mrb[0].mxu0
      %1078 = vmatprep.mubr.bf16.mxu0 0
      %1079 = vmatmul.mubr.bf16.gmra.mrb[0].mxu0 %v940
      %v1080 = vpop.f32.mrb[0].mxu0
      %v1081 = vadd.f32 %v964, %v1080
      %v1082 = vpop.f32.mrb[0].mxu0
      %v1083 = vpop.f32.mrb[0].mxu0
      %v1084 = vadd.f32 %v964, %v1083
      %v1085 = vpop.f32.mrb[0].mxu0
      %1086 = vmatprep.mubr.bf16.mxu0 0
      %1087 = vmatmul.mubr.bf16.gmra.mrb[0].mxu0 %v941
      %v1088 = vpop.f32.mrb[0].mxu0
      %v1089 = vadd.f32 %v964, %v1088
      %v1090 = vpop.f32.mrb[0].mxu0
      %v1091 = vpop.f32.mrb[0].mxu0
      %v1092 = vadd.f32 %v964, %v1091
      %v1093 = vpop.f32.mrb[0].mxu0
      %1094 = vmatprep.mubr.bf16.mxu0 0
      %1095 = vmatmul.mubr.bf16.gmra.mrb[0].mxu0 %v942
      %v1096 = vpop.f32.mrb[0].mxu0
      %v1097 = vadd.f32 %v964, %v1096
      %v1098 = vpop.f32.mrb[0].mxu0
      %v1099 = vpop.f32.mrb[0].mxu0
      %v1100 = vadd.f32 %v964, %v1099
      %v1101 = vpop.f32.mrb[0].mxu0
      %1102 = vmatprep.mubr.bf16.mxu0 0
      %1103 = vmatmul.mubr.bf16.gmra.mrb[0].mxu0 %v943
      %v1104 = vpop.f32.mrb[0].mxu0
      %v1105 = vadd.f32 %v964, %v1104
      %v1106 = vpop.f32.mrb[0].mxu0
      %v1107 = vpop.f32.mrb[0].mxu0
      %v1108 = vadd.f32 %v964, %v1107
      %v1109 = vpop.f32.mrb[0].mxu0
      %1110 = vdwg.mxu0
      %v1111 = vmax.f32 %v1049, 0.0
      %v1112 = vmax.f32 %v1052, 0.0
      %v1113 = vmax.f32 %v1057, 0.0
      %v1114 = vmax.f32 %v1060, 0.0
      %v1115 = vmax.f32 %v1065, 0.0
      %v1116 = vmax.f32 %v1068, 0.0
      %v1117 = vmax.f32 %v1073, 0.0
      %v1118 = vmax.f32 %v1076, 0.0
      %v1119 = vmax.f32 %v1081, 0.0
      %v1120 = vmax.f32 %v1084, 0.0
      %v1121 = vmax.f32 %v1089, 0.0
      %v1122 = vmax.f32 %v1092, 0.0
      %v1123 = vmax.f32 %v1097, 0.0
      %v1124 = vmax.f32 %v1100, 0.0
      %v1125 = vmax.f32 %v1105, 0.0
      %v1126 = vmax.f32 %v1108, 0.0
      %v1128 = vlaneseq
      %v1129 = vshrl.u32 %v1128, 7
      %v1130 = vsub.s32 0, %v1129
      %v1131 = vrot.slane %v313, %v1130
      %v1133 = vmul.f32 %v1111, %v1131
      %v1134 = vmul.f32 %v1112, %v1131
      %v1135 = vmul.f32 %v1113, %v1131
      %v1136 = vmul.f32 %v1114, %v1131
      %v1137 = vmul.f32 %v1115, %v1131
      %v1138 = vmul.f32 %v1116, %v1131
      %v1139 = vmul.f32 %v1117, %v1131
      %v1140 = vmul.f32 %v1118, %v1131
      %v1141 = vmul.f32 %v1119, %v1131
      %v1142 = vmul.f32 %v1120, %v1131
      %v1143 = vmul.f32 %v1121, %v1131
      %v1144 = vmul.f32 %v1122, %v1131
      %v1145 = vmul.f32 %v1123, %v1131
      %v1146 = vmul.f32 %v1124, %v1131
      %v1147 = vmul.f32 %v1125, %v1131
      %v1148 = vmul.f32 %v1126, %v1131
      %1149 = vadd.xlane.f32.xlu0 %v1133
      %v1150 = vpop.xlane.xlu0 %1149
      %1151 = vadd.xlane.f32.xlu0 %v1134
      %v1152 = vpop.xlane.xlu0 %1151
      %1153 = vadd.xlane.f32.xlu0 %v1135
      %v1154 = vpop.xlane.xlu0 %1153
      %1155 = vadd.xlane.f32.xlu0 %v1136
      %v1156 = vpop.xlane.xlu0 %1155
      %1157 = vadd.xlane.f32.xlu0 %v1137
      %v1158 = vpop.xlane.xlu0 %1157
      %1159 = vadd.xlane.f32.xlu0 %v1138
      %v1160 = vpop.xlane.xlu0 %1159
      %1161 = vadd.xlane.f32.xlu0 %v1139
      %v1162 = vpop.xlane.xlu0 %1161
      %1163 = vadd.xlane.f32.xlu0 %v1140
      %v1164 = vpop.xlane.xlu0 %1163
      %1165 = vadd.xlane.f32.xlu0 %v1141
      %v1166 = vpop.xlane.xlu0 %1165
      %1167 = vadd.xlane.f32.xlu0 %v1142
      %v1168 = vpop.xlane.xlu0 %1167
      %1169 = vadd.xlane.f32.xlu0 %v1143
      %v1170 = vpop.xlane.xlu0 %1169
      %1171 = vadd.xlane.f32.xlu0 %v1144
      %v1172 = vpop.xlane.xlu0 %1171
      %1173 = vadd.xlane.f32.xlu0 %v1145
      %v1174 = vpop.xlane.xlu0 %1173
      %1175 = vadd.xlane.f32.xlu0 %v1146
      %v1176 = vpop.xlane.xlu0 %1175
      %1177 = vadd.xlane.f32.xlu0 %v1147
      %v1178 = vpop.xlane.xlu0 %1177
      %1179 = vadd.xlane.f32.xlu0 %v1148
      %v1180 = vpop.xlane.xlu0 %1179
      %v1181 = vadd.f32 %v392, %v536
      %v1182 = vadd.f32 %v393, %v537
      %v1183 = vadd.f32 %v394, %v538
      %v1184 = vadd.f32 %v395, %v539
      %v1185 = vadd.f32 %v396, %v540
      %v1186 = vadd.f32 %v397, %v541
      %v1187 = vadd.f32 %v398, %v542
      %v1188 = vadd.f32 %v399, %v543
      %v1189 = vadd.f32 %v400, %v544
      %v1190 = vadd.f32 %v401, %v545
      %v1191 = vadd.f32 %v402, %v546
      %v1192 = vadd.f32 %v403, %v547
      %v1193 = vadd.f32 %v404, %v548
      %v1194 = vadd.f32 %v405, %v549
      %v1195 = vadd.f32 %v406, %v550
      %v1196 = vadd.f32 %v407, %v551
      %v1197 = vadd.f32 %v1181, %v1150
      %v1198 = vadd.f32 %v1182, %v1152
      %v1199 = vadd.f32 %v1183, %v1154
      %v1200 = vadd.f32 %v1184, %v1156
      %v1201 = vadd.f32 %v1185, %v1158
      %v1202 = vadd.f32 %v1186, %v1160
      %v1203 = vadd.f32 %v1187, %v1162
      %v1204 = vadd.f32 %v1188, %v1164
      %v1205 = vadd.f32 %v1189, %v1166
      %v1206 = vadd.f32 %v1190, %v1168
      %v1207 = vadd.f32 %v1191, %v1170
      %v1208 = vadd.f32 %v1192, %v1172
      %v1209 = vadd.f32 %v1193, %v1174
      %v1210 = vadd.f32 %v1194, %v1176
      %v1211 = vadd.f32 %v1195, %v1178
      %v1212 = vadd.f32 %v1196, %v1180
      %v1213 = vxor.u32 %v1197, 2147483648
      %v1214 = vxor.u32 %v1198, 2147483648
      %v1215 = vxor.u32 %v1199, 2147483648
      %v1216 = vxor.u32 %v1200, 2147483648
      %v1217 = vxor.u32 %v1201, 2147483648
      %v1218 = vxor.u32 %v1202, 2147483648
      %v1219 = vxor.u32 %v1203, 2147483648
      %v1220 = vxor.u32 %v1204, 2147483648
      %v1221 = vxor.u32 %v1205, 2147483648
      %v1222 = vxor.u32 %v1206, 2147483648
      %v1223 = vxor.u32 %v1207, 2147483648
      %v1224 = vxor.u32 %v1208, 2147483648
      %v1225 = vxor.u32 %v1209, 2147483648
      %v1226 = vxor.u32 %v1210, 2147483648
      %v1227 = vxor.u32 %v1211, 2147483648
      %v1228 = vxor.u32 %v1212, 2147483648
      %v1229 = vmul.f32 %v1213, 1.442695
      %v1230 = vpow.pop %v1229
      %v1231 = vmul.f32 %v1214, 1.442695
      %v1232 = vpow.pop %v1231
      %v1233 = vmul.f32 %v1215, 1.442695
      %v1234 = vpow.pop %v1233
      %v1235 = vmul.f32 %v1216, 1.442695
      %v1236 = vpow.pop %v1235
      %v1237 = vmul.f32 %v1217, 1.442695
      %v1238 = vpow.pop %v1237
      %v1239 = vmul.f32 %v1218, 1.442695
      %v1240 = vpow.pop %v1239
      %v1241 = vmul.f32 %v1219, 1.442695
      %v1242 = vpow.pop %v1241
      %v1243 = vmul.f32 %v1220, 1.442695
      %v1244 = vpow.pop %v1243
      %v1245 = vmul.f32 %v1221, 1.442695
      %v1246 = vpow.pop %v1245
      %v1247 = vmul.f32 %v1222, 1.442695
      %v1248 = vpow.pop %v1247
      %v1249 = vmul.f32 %v1223, 1.442695
      %v1250 = vpow.pop %v1249
      %v1251 = vmul.f32 %v1224, 1.442695
      %v1252 = vpow.pop %v1251
      %v1253 = vmul.f32 %v1225, 1.442695
      %v1254 = vpow.pop %v1253
      %v1255 = vmul.f32 %v1226, 1.442695
      %v1256 = vpow.pop %v1255
      %v1257 = vmul.f32 %v1227, 1.442695
      %v1258 = vpow.pop %v1257
      %v1259 = vmul.f32 %v1228, 1.442695
      %v1260 = vpow.pop %v1259
      %v1261 = vadd.f32 %v1230, 1.0
      %v1262 = vadd.f32 %v1232, 1.0
      %v1263 = vadd.f32 %v1234, 1.0
      %v1264 = vadd.f32 %v1236, 1.0
      %v1265 = vadd.f32 %v1238, 1.0
      %v1266 = vadd.f32 %v1240, 1.0
      %v1267 = vadd.f32 %v1242, 1.0
      %v1268 = vadd.f32 %v1244, 1.0
      %v1269 = vadd.f32 %v1246, 1.0
      %v1270 = vadd.f32 %v1248, 1.0
      %v1271 = vadd.f32 %v1250, 1.0
      %v1272 = vadd.f32 %v1252, 1.0
      %v1273 = vadd.f32 %v1254, 1.0
      %v1274 = vadd.f32 %v1256, 1.0
      %v1275 = vadd.f32 %v1258, 1.0
      %v1276 = vadd.f32 %v1260, 1.0
      %v1277 = vrcp.pop %v1261
      %v1278 = vmul.f32 1.0, %v1277
      %v1279 = vrcp.pop %v1262
      %v1280 = vmul.f32 1.0, %v1279
      %v1281 = vrcp.pop %v1263
      %v1282 = vmul.f32 1.0, %v1281
      %v1283 = vrcp.pop %v1264
      %v1284 = vmul.f32 1.0, %v1283
      %v1285 = vrcp.pop %v1265
      %v1286 = vmul.f32 1.0, %v1285
      %v1287 = vrcp.pop %v1266
      %v1288 = vmul.f32 1.0, %v1287
      %v1289 = vrcp.pop %v1267
      %v1290 = vmul.f32 1.0, %v1289
      %v1291 = vrcp.pop %v1268
      %v1292 = vmul.f32 1.0, %v1291
      %v1293 = vrcp.pop %v1269
      %v1294 = vmul.f32 1.0, %v1293
      %v1295 = vrcp.pop %v1270
      %v1296 = vmul.f32 1.0, %v1295
      %v1297 = vrcp.pop %v1271
      %v1298 = vmul.f32 1.0, %v1297
      %v1299 = vrcp.pop %v1272
      %v1300 = vmul.f32 1.0, %v1299
      %v1301 = vrcp.pop %v1273
      %v1302 = vmul.f32 1.0, %v1301
      %v1303 = vrcp.pop %v1274
      %v1304 = vmul.f32 1.0, %v1303
      %v1305 = vrcp.pop %v1275
      %v1306 = vmul.f32 1.0, %v1305
      %v1307 = vrcp.pop %v1276
      %v1308 = vmul.f32 1.0, %v1307
      %vm1309 = vcmask 7168
      %1310 = vst.msk [vmem:[%s275] sm:$0xff] %vm1309, %v1278
      %1311 = vst.msk [vmem:[%s275 + $0x8] sm:$0xff] %vm1309, %v1280
      %1312 = vst.msk [vmem:[%s275 + $0x10] sm:$0xff] %vm1309, %v1282
      %1313 = vst.msk [vmem:[%s275 + $0x18] sm:$0xff] %vm1309, %v1284
      %1314 = vst.msk [vmem:[%s275 + $0x20] sm:$0xff] %vm1309, %v1286
      %1315 = vst.msk [vmem:[%s275 + $0x28] sm:$0xff] %vm1309, %v1288
      %1316 = vst.msk [vmem:[%s275 + $0x30] sm:$0xff] %vm1309, %v1290
      %1317 = vst.msk [vmem:[%s275 + $0x38] sm:$0xff] %vm1309, %v1292
      %1318 = vst.msk [vmem:[%s275 + $0x40] sm:$0xff] %vm1309, %v1294
      %1319 = vst.msk [vmem:[%s275 + $0x48] sm:$0xff] %vm1309, %v1296
      %1320 = vst.msk [vmem:[%s275 + $0x50] sm:$0xff] %vm1309, %v1298
      %1321 = vst.msk [vmem:[%s275 + $0x58] sm:$0xff] %vm1309, %v1300
      %1322 = vst.msk [vmem:[%s275 + $0x60] sm:$0xff] %vm1309, %v1302
      %1323 = vst.msk [vmem:[%s275 + $0x68] sm:$0xff] %vm1309, %v1304
      %1324 = vst.msk [vmem:[%s275 + $0x70] sm:$0xff] %vm1309, %v1306
      %1325 = vst.msk [vmem:[%s275 + $0x78] sm:$0xff] %vm1309, %v1308
      %s1326 = smul.u32 16, %s17
      %p1327 = scmp.lt.s32.totalorder %s1326, 31
      %s1328 = scalar_select %p1327, %s1326, 31
      %s1329 = smul.addr %s1328, 8
      %s1330 = scalar_lea.vmem %s6, %s1329
      // Predicated region
      $region45: #{tpu_custom_call.1} parent=43 // pred_check
        %p1331 = pneg %p171
      $region46: #{tpu_custom_call.1} parent=43 // pred_check_branch
        %1333 = sbr.rel (%p1331) target = $region48
      $region47: #{tpu_custom_call.1} parent=43 // pred_region
        %s1334 = smul.u32 16, %s17
      $region48: #{tpu_custom_call.1} parent=43 // pred_fallthru
        _
    $region44: #{tpu_custom_call.1} parent=5 // pred_fallthru
      _
    %p1335 = scmp.le.s32.totalorder 2, %s12
    // Predicated region
    $region49: #{tpu_custom_call.1} parent=5 // pred_check
      %p1336 = pneg %p1335
    $region50: #{tpu_custom_call.1} parent=5 // pred_check_branch
      %1338 = sbr.rel (%p1336) target = $region52
    $region51: #{tpu_custom_call.1} parent=5 // pred_region
      %s1339 = ssub.s32 %s12, 2
      // Predicated region
      $region53: #{tpu_custom_call.1} parent=51 // pred_check
        %p1340 = pneg %p177
      $region54: #{tpu_custom_call.1} parent=51 // pred_check_branch
        %1342 = sbr.rel (%p1340) target = $region56
      $region55: #{tpu_custom_call.1} parent=51 // pred_region
        %s1343 = smul.u32 16, %s18
        %p1344 = scmp.lt.s32.totalorder %s1343, 31
        %s1345 = scalar_select %p1344, %s1343, 31
        %s1346 = smul.addr %s1345, 8
        %s1347 = scalar_lea.vmem %s6, %s1346
      $region56: #{tpu_custom_call.1} parent=51 // pred_fallthru
        _
    $region52: #{tpu_custom_call.1} parent=5 // pred_fallthru
      _
  $region6: #{tpu_custom_call.1} parent=0 // loop_footer
    %s16 = sadd.s32 1, %s12
  $region7: #{tpu_custom_call.1} parent=0 // loop_footer_branch
    %11 = sbr.rel target = $region3
  $region8: #{tpu_custom_call.1} parent=0 // loop_exit
    _

</llo_original>
